<compile_context>
chip_gen: v7x
topology: tpu7x:2x2x1
jax: 0.10.0
libtpu: 0.0.40
codegen_flags: <defaults>
</compile_context>

<pallas_src>
import functools

import jax
import jax.numpy as jnp
from jax import lax
from jax.experimental import pallas as pl
from jax.experimental.pallas import tpu as pltpu

LANE = 128


def _round_up(x, m):
    return ((x + m - 1) // m) * m


def _pick_tile(total, preferred):
    """Largest multiple of 128 <= preferred that divides `total` (total % 128 == 0)."""
    t = min(preferred, total)
    while total % t != 0:
        t -= LANE
    return max(t, LANE)


def _node_padding(n):
    """Pad node count so the preferred tiles (512 / 2048) divide it cleanly."""
    n_lane = _round_up(n, LANE)
    if n_lane <= 512:
        return n_lane
    return _round_up(n_lane, 512)


# ----------------------------------------------------------------------------
# Kernel 1: feature transform  XW = X @ W   (row-tiled, W resident)
# ----------------------------------------------------------------------------
def _xw_kernel(x_ref, w_ref, o_ref):
    o_ref[...] = jnp.dot(
        x_ref[...], w_ref[...], preferred_element_type=jnp.float32
    ).astype(o_ref.dtype)


def feature_transform(x, w, *, out_dtype=jnp.bfloat16):
    n_p, f_in = x.shape
    f_p = w.shape[1]
    out_bytes = jnp.dtype(out_dtype).itemsize

    def _need(tm_):
        return (2 * tm_ * f_in * x.dtype.itemsize
                + 2 * f_in * f_p * w.dtype.itemsize
                + 2 * tm_ * f_p * out_bytes)

    tm = _pick_tile(n_p, 1024)
    while tm > LANE and _need(tm) > (44 << 20):
        tm = _pick_tile(n_p, tm - LANE)
    grid = (n_p // tm,)

    vmem_limit = int(min(max(2 * _need(tm), 16 << 20), 56 << 20))
    cost = pl.CostEstimate(
        flops=2 * n_p * f_in * f_p,
        transcendentals=0,
        bytes_accessed=(x.size * x.dtype.itemsize
                        + w.size * w.dtype.itemsize
                        + n_p * f_p * out_bytes),
    )
    return pl.pallas_call(
        _xw_kernel,
        out_shape=jax.ShapeDtypeStruct((n_p, f_p), out_dtype),
        grid_spec=pltpu.PrefetchScalarGridSpec(
            num_scalar_prefetch=0,
            grid=grid,
            in_specs=[
                pl.BlockSpec((tm, f_in), lambda i: (i, 0)),
                pl.BlockSpec((f_in, f_p), lambda i: (0, 0)),
            ],
            out_specs=pl.BlockSpec((tm, f_p), lambda i: (i, 0)),
        ),
        compiler_params=pltpu.CompilerParams(
            dimension_semantics=("parallel",),
            vmem_limit_bytes=vmem_limit,
        ),
        cost_estimate=cost,
    )(x, w)


# ----------------------------------------------------------------------------
# Kernel 2: tiled aggregation  out = activation(A_hat @ XW + b) [@ W_next]
#   grid = (row blocks, K blocks); f32 accumulator; epilogue at k == last.
#   XW may be VMEM-resident (constant index map) or tiled along K.
# ----------------------------------------------------------------------------
def _aggregate_kernel(a_ref, xw_ref, b_ref, *rest, activation, valid_cols,
                      xw_resident, tk, fused):
    if fused:
        w_ref, o_ref, acc_ref = rest
    else:
        o_ref, acc_ref = rest
        w_ref = None

    k = pl.program_id(1)

    @pl.when(k == 0)
    def _():
        acc_ref[...] = jnp.zeros_like(acc_ref)

    if xw_resident:
        start = pl.multiple_of(k * tk, LANE)
        xw_blk = xw_ref[pl.ds(start, tk), :]
    else:
        xw_blk = xw_ref[...]

    acc_ref[...] += jnp.dot(
        a_ref[...], xw_blk, preferred_element_type=jnp.float32
    )

    @pl.when(k == pl.num_programs(1) - 1)
    def _():
        h = acc_ref[...] + b_ref[...]  # bias applied once, in the epilogue
        if activation == "relu":
            h = jnp.maximum(h, 0.0)
        elif activation == "log_softmax":
            # Mask padded feature columns so they don't leak into the reduce.
            col = lax.broadcasted_iota(jnp.int32, h.shape, 1)
            h = jnp.where(col < valid_cols, h, -1e30)
            m = jnp.max(h, axis=1, keepdims=True)
            lse = jnp.log(jnp.sum(jnp.exp(h - m), axis=1, keepdims=True)) + m
            h = h - lse
        if fused:
            # Fused next-layer feature transform: (tm, f_p) @ (f_p, f_next).
            h = jnp.dot(h.astype(w_ref.dtype), w_ref[...],
                        preferred_element_type=jnp.float32)
        o_ref[...] = h.astype(o_ref.dtype)


def aggregate(a_hat, xw, b, *, activation, valid_cols, out_dtype, w_next=None):
    n_p = a_hat.shape[0]
    f_p = xw.shape[1]
    fused = w_next is not None
    f_next = w_next.shape[1] if fused else f_p
    out_bytes = jnp.dtype(out_dtype).itemsize

    tm = _pick_tile(n_p, 512)
    tk = _pick_tile(n_p, 2048)
    # Resident XW only when it comfortably fits alongside the big A tiles.
    xw_resident = (n_p * f_p * xw.dtype.itemsize) <= (6 << 20)

    def _need(tk_, resident):
        a_buf = 2 * tm * tk_ * a_hat.dtype.itemsize
        xw_buf = (2 * n_p * f_p if resident else 2 * tk_ * f_p) * xw.dtype.itemsize
        b_buf = 2 * f_p * b.dtype.itemsize
        w_buf = 2 * f_p * f_next * w_next.dtype.itemsize if fused else 0
        o_buf = 2 * tm * f_next * out_bytes
        acc_buf = tm * f_p * 4
        return a_buf + xw_buf + b_buf + w_buf + o_buf + acc_buf

    while tk > LANE and _need(tk, xw_resident) > (44 << 20):
        tk = _pick_tile(n_p, tk - LANE)
    if xw_resident and _need(tk, True) > (44 << 20):
        xw_resident = False

    grid = (n_p // tm, n_p // tk)
    vmem_limit = int(min(max(2 * _need(tk, xw_resident), 16 << 20), 56 << 20))

    in_specs = [pl.BlockSpec((tm, tk), lambda i, k: (i, k))]
    if xw_resident:
        in_specs.append(pl.BlockSpec((n_p, f_p), lambda i, k: (0, 0)))
    else:
        in_specs.append(pl.BlockSpec((tk, f_p), lambda i, k: (k, 0)))
    in_specs.append(pl.BlockSpec((1, f_p), lambda i, k: (0, 0)))
    args = [a_hat, xw, b]
    if fused:
        in_specs.append(pl.BlockSpec((f_p, f_next), lambda i, k: (0, 0)))
        args.append(w_next)

    flops = 2 * n_p * n_p * f_p + (2 * n_p * f_p * f_next if fused else 0)
    cost = pl.CostEstimate(
        flops=flops,
        transcendentals=n_p * f_p if activation == "log_softmax" else 0,
        bytes_accessed=(
            a_hat.size * a_hat.dtype.itemsize
            + xw.size * xw.dtype.itemsize
            + b.size * b.dtype.itemsize
            + (w_next.size * w_next.dtype.itemsize if fused else 0)
            + n_p * f_next * out_bytes
        ),
    )
    kernel = functools.partial(
        _aggregate_kernel, activation=activation, valid_cols=valid_cols,
        xw_resident=xw_resident, tk=tk, fused=fused,
    )
    return pl.pallas_call(
        kernel,
        out_shape=jax.ShapeDtypeStruct((n_p, f_next), out_dtype),
        grid_spec=pltpu.PrefetchScalarGridSpec(
            num_scalar_prefetch=0,
            grid=grid,
            in_specs=in_specs,
            out_specs=pl.BlockSpec((tm, f_next), lambda i, k: (i, 0)),
            scratch_shapes=[pltpu.VMEM((tm, f_p), jnp.float32)],
        ),
        compiler_params=pltpu.CompilerParams(
            dimension_semantics=("parallel", "arbitrary"),
            vmem_limit_bytes=vmem_limit,
        ),
        cost_estimate=cost,
    )(*args)


# ----------------------------------------------------------------------------
# Glue (plain JAX): PyG gcn_norm dense adjacency, bf16, zero-padded.
# ----------------------------------------------------------------------------
def normalized_adjacency_bf16(edge_index, num_nodes, padded_nodes):
    src = edge_index[0]  # message source j
    dst = edge_index[1]  # message target i
    a = jnp.zeros((num_nodes, num_nodes), jnp.float32)
    a = a.at[dst, src].add(1.0)                      # A[i, j] = 1 for edge j->i
    # add_remaining_self_loops semantics: keep an existing self-loop weight,
    # only add weight-1 self-loops where none exists.
    idx = jnp.arange(num_nodes)
    diag = jnp.diagonal(a)
    a = a.at[idx, idx].set(jnp.where(diag > 0.0, diag, 1.0))
    deg = jnp.sum(a, axis=1)
    dinv = jnp.where(deg > 0.0, lax.rsqrt(deg), 0.0)
    a = (dinv[:, None] * a) * dinv[None, :]
    a = a.astype(jnp.bfloat16)                       # cast BEFORE padding
    a_p = jnp.zeros((padded_nodes, padded_nodes), jnp.bfloat16)
    return a_p.at[:num_nodes, :num_nodes].set(a)


# ----------------------------------------------------------------------------
# GNN forward: conv1 -> relu -> conv2 -> log_softmax(dim=1)
# ----------------------------------------------------------------------------
def gnn_forward(params, x, edge_index):
    n, f_in = x.shape
    f_h = params["w1"].shape[1]
    f_out = params["w2"].shape[1]

    n_p = _node_padding(n)
    f_in_p = _round_up(f_in, LANE)
    f_h_p = _round_up(f_h, LANE)
    f_out_p = _round_up(f_out, LANE)

    # Zero-padded, lane-dense operands; bf16 for the MXU, f32 biases.
    x_p = jnp.zeros((n_p, f_in_p), jnp.bfloat16).at[:n, :f_in].set(
        x.astype(jnp.bfloat16))
    w1_p = jnp.zeros((f_in_p, f_h_p), jnp.bfloat16).at[:f_in, :f_h].set(
        params["w1"].astype(jnp.bfloat16))
    w2_p = jnp.zeros((f_h_p, f_out_p), jnp.bfloat16).at[:f_h, :f_out].set(
        params["w2"].astype(jnp.bfloat16))
    b1_p = jnp.zeros((1, f_h_p), jnp.float32).at[:, :f_h].set(params["b1"])
    b2_p = jnp.zeros((1, f_out_p), jnp.float32).at[:, :f_out].set(params["b2"])

    a_p = normalized_adjacency_bf16(edge_index, n, n_p)

    # Layer 1 (+ fused layer-2 transform):
    #   xw2 = relu(A_hat @ (X @ W1) + b1) @ W2
    xw1 = feature_transform(x_p, w1_p, out_dtype=jnp.bfloat16)
    xw2 = aggregate(a_p, xw1, b1_p, activation="relu", valid_cols=f_h,
                    out_dtype=jnp.bfloat16, w_next=w2_p)

    # Layer 2: log_softmax(A_hat @ xw2 + b2, dim=1)
    out_p = aggregate(a_p, xw2, b2_p, activation="log_softmax",
                      valid_cols=f_out, out_dtype=jnp.float32)

    return out_p[:n, :f_out]


gnn_forward_jit = jax.jit(gnn_forward)


def init_params(key, input_dim, hidden_dim, output_dim):
    k1, k2 = jax.random.split(key)
    # Glorot-style scaling; biases zero (matches GCNConv zeros(bias) init).
    w1 = jax.random.normal(k1, (input_dim, hidden_dim), jnp.float32) * (
        1.0 / jnp.sqrt(jnp.float32(input_dim)))
    w2 = jax.random.normal(k2, (hidden_dim, output_dim), jnp.float32) * (
        1.0 / jnp.sqrt(jnp.float32(hidden_dim)))
    b1 = jnp.zeros((1, hidden_dim), jnp.float32)
    b2 = jnp.zeros((1, output_dim), jnp.float32)
    return {"w1": w1, "b1": b1, "w2": w2, "b2": b2}


if __name__ == "__main__":
    key = jax.random.PRNGKey(0)
    num_nodes = 8
    input_dim, hidden_dim, output_dim = 16, 32, 8

    kx, kp = jax.random.split(key)
    x = jax.random.normal(kx, (num_nodes, input_dim), jnp.float32)

    # Deterministic undirected ring graph (both directions), PyG edge_index style.
    src = jnp.arange(num_nodes, dtype=jnp.int32)
    dst = (src + 1) % num_nodes
    edge_index = jnp.stack(
        [jnp.concatenate([src, dst]), jnp.concatenate([dst, src])], axis=0
    )
    # data.batch is unpacked but unused in the reference forward pass.

    params = init_params(kp, input_dim, hidden_dim, output_dim)

    out = gnn_forward_jit(params, x, edge_index)
    out = jax.block_until_ready(out)

    # Sanity: log_softmax rows must sum to ~1 in probability space.
    row_sums = jnp.exp(out).sum(axis=1)
    assert out.shape == (num_nodes, output_dim)
    assert bool(jnp.all(jnp.isfinite(out)))
    assert bool(jnp.all(jnp.abs(row_sums - 1.0) < 1e-4))

    print("KERNEL_OK")
</pallas_src>

<mosaic_0001>
module attributes {stable_mosaic.version = 11 : i64} {
  func.func private @main(%arg0: i32) attributes {dimension_semantics = [#tpu.dimension_semantics<core_parallel>], iteration_bounds = array<i64: 2>, tpu.core_type = #tpu.core_type<sc_scalar_subcore>, window_params = []} {
    return
  }
}

module attributes {stable_mosaic.version = 11 : i64} {
  func.func private @main(%arg0: i32) attributes {dimension_semantics = [#tpu.dimension_semantics<core_parallel>], iteration_bounds = array<i64: 2>, tpu.core_type = #tpu.core_type<sc_scalar_subcore>, window_params = []} {
    return
  }
}

module attributes {stable_mosaic.version = 11 : i64} {
  func.func @_xw_kernel(%arg0: i32, %arg1: memref<128x128xbf16, #tpu.memory_space<vmem>>, %arg2: memref<128x128xbf16, #tpu.memory_space<vmem>>, %arg3: memref<128x128xbf16, #tpu.memory_space<vmem>>) attributes {dimension_semantics = [#tpu.dimension_semantics<parallel>], iteration_bounds = array<i64: 1>, scalar_prefetch = 0 : i64, scratch_operands = 0 : i64, tpu.core_type = #tpu.core_type<tc>, window_params = [{transform_indices = @transform_0, window_bounds = array<i64: 128, 128>}, {pipeline_mode = #tpu.pipeline_mode<synchronous>, transform_indices = @transform_1, window_bounds = array<i64: 128, 128>}, {transform_indices = @transform_2, window_bounds = array<i64: 128, 128>}]} {
    %c0 = arith.constant 0 : index
    %c0_0 = arith.constant 0 : index
    %0 = vector.load %arg1[%c0, %c0_0] : memref<128x128xbf16, #tpu.memory_space<vmem>>, vector<128x128xbf16>
    %c0_1 = arith.constant 0 : index
    %c0_2 = arith.constant 0 : index
    %1 = vector.load %arg2[%c0_1, %c0_2] : memref<128x128xbf16, #tpu.memory_space<vmem>>, vector<128x128xbf16>
    %cst = arith.constant dense<0.000000e+00> : vector<128x128xf32>
    %2 = tpu.matmul %0, %1, %cst {dimension_numbers = #tpu.dot_dimension_numbers<[1], [0], [0], [1], [0, 0, 1, 1], [], []>} : vector<128x128xbf16>, vector<128x128xbf16>, vector<128x128xf32> -> vector<128x128xf32>
    %3 = arith.truncf %2 : vector<128x128xf32> to vector<128x128xbf16>
    %c0_3 = arith.constant 0 : index
    %c0_4 = arith.constant 0 : index
    %4 = vector.load %arg3[%c0_3, %c0_4] : memref<128x128xbf16, #tpu.memory_space<vmem>>, vector<128x128xbf16>
    tpu.vector_store %arg3[%c0_3, %c0_4], %3 {strides = array<i32>} : memref<128x128xbf16, #tpu.memory_space<vmem>>, vector<128x128xbf16>,
    return
  }
  func.func @transform_0(%arg0: i32) -> (i32, i32) {
    %c0_i32 = arith.constant 0 : i32
    %c0_i32_0 = arith.constant 0 : i32
    return %arg0, %c0_i32 : i32, i32
  }
  func.func @transform_1(%arg0: i32) -> (i32, i32) {
    %c0_i32 = arith.constant 0 : i32
    %c0_i32_0 = arith.constant 0 : i32
    %c0_i32_1 = arith.constant 0 : i32
    return %c0_i32, %c0_i32_0 : i32, i32
  }
  func.func @transform_2(%arg0: i32) -> (i32, i32) {
    %c0_i32 = arith.constant 0 : i32
    %c0_i32_0 = arith.constant 0 : i32
    return %arg0, %c0_i32 : i32, i32
  }
}

module attributes {stable_mosaic.version = 11 : i64} {
  func.func @_aggregate_kernel(%arg0: i32, %arg1: i32, %arg2: memref<128x128xbf16, #tpu.memory_space<vmem>>, %arg3: memref<128x128xbf16, #tpu.memory_space<vmem>>, %arg4: memref<1x128xf32, #tpu.memory_space<vmem>>, %arg5: memref<128x128xbf16, #tpu.memory_space<vmem>>, %arg6: memref<128x128xbf16, #tpu.memory_space<vmem>>, %arg7: memref<128x128xf32, #tpu.memory_space<vmem>>) attributes {dimension_semantics = [#tpu.dimension_semantics<parallel>, #tpu.dimension_semantics<arbitrary>], iteration_bounds = array<i64: 1, 1>, scalar_prefetch = 0 : i64, scratch_operands = 1 : i64, tpu.core_type = #tpu.core_type<tc>, window_params = [{transform_indices = @transform_0, window_bounds = array<i64: 128, 128>}, {pipeline_mode = #tpu.pipeline_mode<synchronous>, transform_indices = @transform_1, window_bounds = array<i64: 128, 128>}, {pipeline_mode = #tpu.pipeline_mode<synchronous>, transform_indices = @transform_2, window_bounds = array<i64: 1, 128>}, {pipeline_mode = #tpu.pipeline_mode<synchronous>, transform_indices = @transform_3, window_bounds = array<i64: 128, 128>}, {transform_indices = @transform_4, window_bounds = array<i64: 128, 128>}]} {
    %c0_i32 = arith.constant 0 : i32
    %0 = arith.cmpi eq, %arg1, %c0_i32 : i32
    %1 = arith.extui %0 : i1 to i32
    %c0_i32_0 = arith.constant 0 : i32
    %2 = arith.cmpi ne, %1, %c0_i32_0 : i32
    scf.if %2 {
      %cst_9 = arith.constant 0.000000e+00 : f32
      %15 = vector.broadcast %cst_9 : f32 to vector<128x128xf32>
      %c0_10 = arith.constant 0 : index
      %c0_11 = arith.constant 0 : index
      %16 = vector.load %arg7[%c0_10, %c0_11] : memref<128x128xf32, #tpu.memory_space<vmem>>, vector<128x128xf32>
      tpu.vector_store %arg7[%c0_10, %c0_11], %15 {strides = array<i32>} : memref<128x128xf32, #tpu.memory_space<vmem>>, vector<128x128xf32>,
    } else {
    }
    %c128_i32 = arith.constant 128 : i32
    %3 = arith.muli %arg1, %c128_i32 : i32
    %4 = tpu.assume_multiple %3, 128 : i32
    %5 = arith.index_cast %4 : i32 to index
    %c0 = arith.constant 0 : index
    %6 = vector.load %arg3[%5, %c0] : memref<128x128xbf16, #tpu.memory_space<vmem>>, vector<128x128xbf16>
    %c0_1 = arith.constant 0 : index
    %c0_2 = arith.constant 0 : index
    %7 = vector.load %arg7[%c0_1, %c0_2] : memref<128x128xf32, #tpu.memory_space<vmem>>, vector<128x128xf32>
    %c0_3 = arith.constant 0 : index
    %c0_4 = arith.constant 0 : index
    %8 = vector.load %arg2[%c0_3, %c0_4] : memref<128x128xbf16, #tpu.memory_space<vmem>>, vector<128x128xbf16>
    %cst = arith.constant dense<0.000000e+00> : vector<128x128xf32>
    %9 = tpu.matmul %8, %6, %cst {dimension_numbers = #tpu.dot_dimension_numbers<[1], [0], [0], [1], [0, 0, 1, 1], [], []>} : vector<128x128xbf16>, vector<128x128xbf16>, vector<128x128xf32> -> vector<128x128xf32>
    %10 = arith.addf %7, %9 : vector<128x128xf32>
    %c0_5 = arith.constant 0 : index
    %c0_6 = arith.constant 0 : index
    %11 = vector.load %arg7[%c0_5, %c0_6] : memref<128x128xf32, #tpu.memory_space<vmem>>, vector<128x128xf32>
    tpu.vector_store %arg7[%c0_5, %c0_6], %10 {strides = array<i32>} : memref<128x128xf32, #tpu.memory_space<vmem>>, vector<128x128xf32>,
    %c0_i32_7 = arith.constant 0 : i32
    %12 = arith.cmpi eq, %arg1, %c0_i32_7 : i32
    %13 = arith.extui %12 : i1 to i32
    %c0_i32_8 = arith.constant 0 : i32
    %14 = arith.cmpi ne, %13, %c0_i32_8 : i32
    scf.if %14 {
      %c0_9 = arith.constant 0 : index
      %c0_10 = arith.constant 0 : index
      %15 = vector.load %arg7[%c0_9, %c0_10] : memref<128x128xf32, #tpu.memory_space<vmem>>, vector<128x128xf32>
      %c0_11 = arith.constant 0 : index
      %c0_12 = arith.constant 0 : index
      %16 = vector.load %arg4[%c0_11, %c0_12] : memref<1x128xf32, #tpu.memory_space<vmem>>, vector<1x128xf32>
      %17 = vector.broadcast %16 : vector<1x128xf32> to vector<128x128xf32>
      %18 = arith.addf %15, %17 : vector<128x128xf32>
      %cst_13 = arith.constant 0.000000e+00 : f32
      %19 = vector.broadcast %cst_13 : f32 to vector<128x128xf32>
      %20 = arith.maximumf %18, %19 : vector<128x128xf32>
      %21 = arith.truncf %20 : vector<128x128xf32> to vector<128x128xbf16>
      %c0_14 = arith.constant 0 : index
      %c0_15 = arith.constant 0 : index
      %22 = vector.load %arg5[%c0_14, %c0_15] : memref<128x128xbf16, #tpu.memory_space<vmem>>, vector<128x128xbf16>
      %cst_16 = arith.constant dense<0.000000e+00> : vector<128x128xf32>
      %23 = tpu.matmul %21, %22, %cst_16 {dimension_numbers = #tpu.dot_dimension_numbers<[1], [0], [0], [1], [0, 0, 1, 1], [], []>} : vector<128x128xbf16>, vector<128x128xbf16>, vector<128x128xf32> -> vector<128x128xf32>
      %24 = arith.truncf %23 : vector<128x128xf32> to vector<128x128xbf16>
      %c0_17 = arith.constant 0 : index
      %c0_18 = arith.constant 0 : index
      %25 = vector.load %arg6[%c0_17, %c0_18] : memref<128x128xbf16, #tpu.memory_space<vmem>>, vector<128x128xbf16>
      tpu.vector_store %arg6[%c0_17, %c0_18], %24 {strides = array<i32>} : memref<128x128xbf16, #tpu.memory_space<vmem>>, vector<128x128xbf16>,
    } else {
    }
    return
  }
  func.func @transform_0(%arg0: i32, %arg1: i32) -> (i32, i32) {
    %c0_i32 = arith.constant 0 : i32
    return %arg0, %arg1 : i32, i32
  }
  func.func @transform_1(%arg0: i32, %arg1: i32) -> (i32, i32) {
    %c0_i32 = arith.constant 0 : i32
    %c0_i32_0 = arith.constant 0 : i32
    %c0_i32_1 = arith.constant 0 : i32
    return %c0_i32, %c0_i32_0 : i32, i32
  }
  func.func @transform_2(%arg0: i32, %arg1: i32) -> (i32, i32) {
    %c0_i32 = arith.constant 0 : i32
    %c0_i32_0 = arith.constant 0 : i32
    %c0_i32_1 = arith.constant 0 : i32
    return %c0_i32, %c0_i32_0 : i32, i32
  }
  func.func @transform_3(%arg0: i32, %arg1: i32) -> (i32, i32) {
    %c0_i32 = arith.constant 0 : i32
    %c0_i32_0 = arith.constant 0 : i32
    %c0_i32_1 = arith.constant 0 : i32
    return %c0_i32, %c0_i32_0 : i32, i32
  }
  func.func @transform_4(%arg0: i32, %arg1: i32) -> (i32, i32) {
    %c0_i32 = arith.constant 0 : i32
    %c0_i32_0 = arith.constant 0 : i32
    return %arg0, %c0_i32 : i32, i32
  }
}

module attributes {stable_mosaic.version = 11 : i64} {
  func.func @_aggregate_kernel(%arg0: i32, %arg1: i32, %arg2: memref<128x128xbf16, #tpu.memory_space<vmem>>, %arg3: memref<128x128xbf16, #tpu.memory_space<vmem>>, %arg4: memref<1x128xf32, #tpu.memory_space<vmem>>, %arg5: memref<128x128xf32, #tpu.memory_space<vmem>>, %arg6: memref<128x128xf32, #tpu.memory_space<vmem>>) attributes {dimension_semantics = [#tpu.dimension_semantics<parallel>, #tpu.dimension_semantics<arbitrary>], iteration_bounds = array<i64: 1, 1>, scalar_prefetch = 0 : i64, scratch_operands = 1 : i64, tpu.core_type = #tpu.core_type<tc>, window_params = [{transform_indices = @transform_0, window_bounds = array<i64: 128, 128>}, {pipeline_mode = #tpu.pipeline_mode<synchronous>, transform_indices = @transform_1, window_bounds = array<i64: 128, 128>}, {pipeline_mode = #tpu.pipeline_mode<synchronous>, transform_indices = @transform_2, window_bounds = array<i64: 1, 128>}, {transform_indices = @transform_3, window_bounds = array<i64: 128, 128>}]} {
    %c0_i32 = arith.constant 0 : i32
    %0 = arith.cmpi eq, %arg1, %c0_i32 : i32
    %1 = arith.extui %0 : i1 to i32
    %c0_i32_0 = arith.constant 0 : i32
    %2 = arith.cmpi ne, %1, %c0_i32_0 : i32
    scf.if %2 {
      %cst_9 = arith.constant 0.000000e+00 : f32
      %15 = vector.broadcast %cst_9 : f32 to vector<128x128xf32>
      %c0_10 = arith.constant 0 : index
      %c0_11 = arith.constant 0 : index
      %16 = vector.load %arg6[%c0_10, %c0_11] : memref<128x128xf32, #tpu.memory_space<vmem>>, vector<128x128xf32>
      tpu.vector_store %arg6[%c0_10, %c0_11], %15 {strides = array<i32>} : memref<128x128xf32, #tpu.memory_space<vmem>>, vector<128x128xf32>,
    } else {
    }
    %c128_i32 = arith.constant 128 : i32
    %3 = arith.muli %arg1, %c128_i32 : i32
    %4 = tpu.assume_multiple %3, 128 : i32
    %5 = arith.index_cast %4 : i32 to index
    %c0 = arith.constant 0 : index
    %6 = vector.load %arg3[%5, %c0] : memref<128x128xbf16, #tpu.memory_space<vmem>>, vector<128x128xbf16>
    %c0_1 = arith.constant 0 : index
    %c0_2 = arith.constant 0 : index
    %7 = vector.load %arg6[%c0_1, %c0_2] : memref<128x128xf32, #tpu.memory_space<vmem>>, vector<128x128xf32>
    %c0_3 = arith.constant 0 : index
    %c0_4 = arith.constant 0 : index
    %8 = vector.load %arg2[%c0_3, %c0_4] : memref<128x128xbf16, #tpu.memory_space<vmem>>, vector<128x128xbf16>
    %cst = arith.constant dense<0.000000e+00> : vector<128x128xf32>
    %9 = tpu.matmul %8, %6, %cst {dimension_numbers = #tpu.dot_dimension_numbers<[1], [0], [0], [1], [0, 0, 1, 1], [], []>} : vector<128x128xbf16>, vector<128x128xbf16>, vector<128x128xf32> -> vector<128x128xf32>
    %10 = arith.addf %7, %9 : vector<128x128xf32>
    %c0_5 = arith.constant 0 : index
    %c0_6 = arith.constant 0 : index
    %11 = vector.load %arg6[%c0_5, %c0_6] : memref<128x128xf32, #tpu.memory_space<vmem>>, vector<128x128xf32>
    tpu.vector_store %arg6[%c0_5, %c0_6], %10 {strides = array<i32>} : memref<128x128xf32, #tpu.memory_space<vmem>>, vector<128x128xf32>,
    %c0_i32_7 = arith.constant 0 : i32
    %12 = arith.cmpi eq, %arg1, %c0_i32_7 : i32
    %13 = arith.extui %12 : i1 to i32
    %c0_i32_8 = arith.constant 0 : i32
    %14 = arith.cmpi ne, %13, %c0_i32_8 : i32
    scf.if %14 {
      %c0_9 = arith.constant 0 : index
      %c0_10 = arith.constant 0 : index
      %15 = vector.load %arg6[%c0_9, %c0_10] : memref<128x128xf32, #tpu.memory_space<vmem>>, vector<128x128xf32>
      %c0_11 = arith.constant 0 : index
      %c0_12 = arith.constant 0 : index
      %16 = vector.load %arg4[%c0_11, %c0_12] : memref<1x128xf32, #tpu.memory_space<vmem>>, vector<1x128xf32>
      %17 = vector.broadcast %16 : vector<1x128xf32> to vector<128x128xf32>
      %18 = arith.addf %15, %17 : vector<128x128xf32>
      %19 = tpu.iota {dimensions = array<i32: 1>} : vector<128x128xi32>
      %c8_i32 = arith.constant 8 : i32
      %20 = vector.broadcast %c8_i32 : i32 to vector<128x128xi32>
      %21 = arith.cmpi slt, %19, %20 : vector<128x128xi32>
      %cst_13 = arith.constant -1.000000e+30 : f32
      %22 = vector.broadcast %cst_13 : f32 to vector<128x128xf32>
      %23 = arith.select %21, %18, %22 : vector<128x128xi1>, vector<128x128xf32>
      %cst_14 = arith.constant dense<0xFF800000> : vector<128xf32>
      %24 = vector.multi_reduction <maximumf>, %23, %cst_14 [1] : vector<128x128xf32> to vector<128xf32>
      %25 = vector.shape_cast %24 : vector<128xf32> to vector<128x1xf32>
      %26 = vector.broadcast %25 : vector<128x1xf32> to vector<128x128xf32>
      %27 = arith.subf %23, %26 : vector<128x128xf32>
      %28 = math.exp %27 : vector<128x128xf32>
      %cst_15 = arith.constant dense<0.000000e+00> : vector<128xf32>
      %29 = vector.multi_reduction <add>, %28, %cst_15 [1] : vector<128x128xf32> to vector<128xf32>
      %30 = vector.shape_cast %29 : vector<128xf32> to vector<128x1xf32>
      %31 = math.log %30 : vector<128x1xf32>
      %32 = arith.addf %31, %25 : vector<128x1xf32>
      %33 = vector.broadcast %32 : vector<128x1xf32> to vector<128x128xf32>
      %34 = arith.subf %23, %33 : vector<128x128xf32>
      %c0_16 = arith.constant 0 : index
      %c0_17 = arith.constant 0 : index
      %35 = vector.load %arg5[%c0_16, %c0_17] : memref<128x128xf32, #tpu.memory_space<vmem>>, vector<128x128xf32>
      tpu.vector_store %arg5[%c0_16, %c0_17], %34 {strides = array<i32>} : memref<128x128xf32, #tpu.memory_space<vmem>>, vector<128x128xf32>,
    } else {
    }
    return
  }
  func.func @transform_0(%arg0: i32, %arg1: i32) -> (i32, i32) {
    %c0_i32 = arith.constant 0 : i32
    return %arg0, %arg1 : i32, i32
  }
  func.func @transform_1(%arg0: i32, %arg1: i32) -> (i32, i32) {
    %c0_i32 = arith.constant 0 : i32
    %c0_i32_0 = arith.constant 0 : i32
    %c0_i32_1 = arith.constant 0 : i32
    return %c0_i32, %c0_i32_0 : i32, i32
  }
  func.func @transform_2(%arg0: i32, %arg1: i32) -> (i32, i32) {
    %c0_i32 = arith.constant 0 : i32
    %c0_i32_0 = arith.constant 0 : i32
    %c0_i32_1 = arith.constant 0 : i32
    return %c0_i32, %c0_i32_0 : i32, i32
  }
  func.func @transform_3(%arg0: i32, %arg1: i32) -> (i32, i32) {
    %c0_i32 = arith.constant 0 : i32
    %c0_i32_0 = arith.constant 0 : i32
    return %arg0, %c0_i32 : i32, i32
  }
}

</mosaic_0001>

<llo_original>
// kernel: gnn_forward.3
$region0: #{gnn_forward.3}
  #allocation0 [shape = 'u32[]', space=smem, size = 0x4, offset = 0x4, fixed_abs, tag = 'smem constant byte address 0x4 - core index']
  #allocation1 [shape = 'u32[144,128]{1,0:T(1,128)}', space=vmem, size = 0x12000, scoped, tag = 'internal scratch']
  %s0 = inlined_call_operand.vmem [shape: bf16[128,128], index: 0, kind: input, shape index: {}]
  %s1 = inlined_call_operand.vmem [shape: bf16[128,128], index: 1, kind: input, shape index: {}]
  %s2 = inlined_call_operand.vmem [shape: bf16[128,128], index: 2, kind: output, shape index: {}]
  %s3 = sld [smem:[#allocation0]]
  $region18: #{gnn_forward.3} parent=0
    _
  %s5 = ssub.s32 1, %s3
  %s6 = scalar_select 0, %s5, %s3
  // Predicated region
  $region2: #{gnn_forward.3} parent=0 // pred_check
    _
  $region3: #{gnn_forward.3} parent=0 // pred_check_branch
    %8 = sbr.rel (0) target = $region5
  $region4: #{gnn_forward.3} parent=0 // pred_region
    _
  $region5: #{gnn_forward.3} parent=0 // pred_fallthru
    _
  // Predicated region
  $region6: #{gnn_forward.3} parent=0 // pred_check
    _
  $region7: #{gnn_forward.3} parent=0 // pred_check_branch
    %10 = sbr.rel (0) target = $region9
  $region8: #{gnn_forward.3} parent=0 // pred_region
    _
  $region9: #{gnn_forward.3} parent=0 // pred_fallthru
    _
  %v12 = vld [vmem:[%s0] sm:$0xf]
  %v13 = vld [vmem:[%s0 + $0x4] sm:$0xf]
  %v14 = vld [vmem:[%s0 + $0x8] sm:$0xf]
  %v15 = vld [vmem:[%s0 + $0xc] sm:$0xf]
  %v16 = vld [vmem:[%s0 + $0x10] sm:$0xf]
  %v17 = vld [vmem:[%s0 + $0x14] sm:$0xf]
  %v18 = vld [vmem:[%s0 + $0x18] sm:$0xf]
  %v19 = vld [vmem:[%s0 + $0x1c] sm:$0xf]
  %v20 = vld [vmem:[%s0 + $0x20] sm:$0xf]
  %v21 = vld [vmem:[%s0 + $0x24] sm:$0xf]
  %v22 = vld [vmem:[%s0 + $0x28] sm:$0xf]
  %v23 = vld [vmem:[%s0 + $0x2c] sm:$0xf]
  %v24 = vld [vmem:[%s0 + $0x30] sm:$0xf]
  %v25 = vld [vmem:[%s0 + $0x34] sm:$0xf]
  %v26 = vld [vmem:[%s0 + $0x38] sm:$0xf]
  %v27 = vld [vmem:[%s0 + $0x3c] sm:$0xf]
  %v28 = vld [vmem:[%s1] sm:$0xf]
  %v29 = vld [vmem:[%s1 + $0x4] sm:$0xf]
  %v30 = vld [vmem:[%s1 + $0x8] sm:$0xf]
  %v31 = vld [vmem:[%s1 + $0xc] sm:$0xf]
  %v32 = vld [vmem:[%s1 + $0x10] sm:$0xf]
  %v33 = vld [vmem:[%s1 + $0x14] sm:$0xf]
  %v34 = vld [vmem:[%s1 + $0x18] sm:$0xf]
  %v35 = vld [vmem:[%s1 + $0x1c] sm:$0xf]
  %v36 = vld [vmem:[%s1 + $0x20] sm:$0xf]
  %v37 = vld [vmem:[%s1 + $0x24] sm:$0xf]
  %v38 = vld [vmem:[%s1 + $0x28] sm:$0xf]
  %v39 = vld [vmem:[%s1 + $0x2c] sm:$0xf]
  %v40 = vld [vmem:[%s1 + $0x30] sm:$0xf]
  %v41 = vld [vmem:[%s1 + $0x34] sm:$0xf]
  %v42 = vld [vmem:[%s1 + $0x38] sm:$0xf]
  %v43 = vld [vmem:[%s1 + $0x3c] sm:$0xf]
  %v60 = vunpack.c.l.b16 %v12
  %v61 = vunpack.c.l.b16 %v13
  %v62 = vunpack.c.l.b16 %v14
  %v63 = vunpack.c.l.b16 %v15
  %v64 = vunpack.c.l.b16 %v16
  %v65 = vunpack.c.l.b16 %v17
  %v66 = vunpack.c.l.b16 %v18
  %v67 = vunpack.c.l.b16 %v19
  %v68 = vunpack.c.l.b16 %v20
  %v69 = vunpack.c.l.b16 %v21
  %v70 = vunpack.c.l.b16 %v22
  %v71 = vunpack.c.l.b16 %v23
  %v72 = vunpack.c.l.b16 %v24
  %v73 = vunpack.c.l.b16 %v25
  %v74 = vunpack.c.l.b16 %v26
  %v75 = vunpack.c.l.b16 %v27
  %v76 = vpack.c.b16 %v61, %v60
  %v77 = vpack.c.b16 %v63, %v62
  %v78 = vpack.c.b16 %v65, %v64
  %v79 = vpack.c.b16 %v67, %v66
  %v80 = vpack.c.b16 %v69, %v68
  %v81 = vpack.c.b16 %v71, %v70
  %v82 = vpack.c.b16 %v73, %v72
  %v83 = vpack.c.b16 %v75, %v74
  %v108 = vunpack.c.l.b16 %v28
  %v109 = vunpack.c.l.b16 %v29
  %v110 = vunpack.c.l.b16 %v30
  %v111 = vunpack.c.l.b16 %v31
  %v112 = vunpack.c.l.b16 %v32
  %v113 = vunpack.c.l.b16 %v33
  %v114 = vunpack.c.l.b16 %v34
  %v115 = vunpack.c.l.b16 %v35
  %v116 = vunpack.c.l.b16 %v36
  %v117 = vunpack.c.l.b16 %v37
  %v118 = vunpack.c.l.b16 %v38
  %v119 = vunpack.c.l.b16 %v39
  %v120 = vunpack.c.l.b16 %v40
  %v121 = vunpack.c.l.b16 %v41
  %v122 = vunpack.c.l.b16 %v42
  %v123 = vunpack.c.l.b16 %v43
  %v124 = vpack.c.b16 %v109, %v108
  %v125 = vpack.c.b16 %v111, %v110
  %v126 = vpack.c.b16 %v113, %v112
  %v127 = vpack.c.b16 %v115, %v114
  %v128 = vpack.c.b16 %v117, %v116
  %v129 = vpack.c.b16 %v119, %v118
  %v130 = vpack.c.b16 %v121, %v120
  %v131 = vpack.c.b16 %v123, %v122
  %140 = vmatprep.subr.bf16.mxu0 0
  %141 = vmatpush1.bf16.msra.mxu0 %v124
  %142 = vmatprep.subr.bf16.mxu0 0
  %143 = vmatpush1.bf16.msra.mxu0 %v125
  %144 = vmatprep.subr.bf16.mxu0 0
  %145 = vmatpush1.bf16.msra.mxu0 %v126
  %146 = vmatprep.subr.bf16.mxu0 0
  %147 = vmatpush1.bf16.msra.mxu0 %v127
  %148 = vmatprep.subr.bf16.mxu0 0
  %149 = vmatpush1.bf16.msra.mxu0 %v128
  %150 = vmatprep.subr.bf16.mxu0 0
  %151 = vmatpush1.bf16.msra.mxu0 %v129
  %152 = vmatprep.subr.bf16.mxu0 0
  %153 = vmatpush1.bf16.msra.mxu0 %v130
  %154 = vmatprep.subr.bf16.mxu0 0
  %155 = vmatpush1.bf16.msra.mxu0 %v131
  %156 = vmatprep.subr.bf16.mxu0 0
  %157 = vmatpush1.bf16.msra.mxu0 0
  %158 = vmatprep.subr.bf16.mxu0 0
  %159 = vmatpush1.bf16.msra.mxu0 0
  %160 = vmatprep.subr.bf16.mxu0 0
  %161 = vmatpush1.bf16.msra.mxu0 0
  %162 = vmatprep.subr.bf16.mxu0 0
  %163 = vmatpush1.bf16.msra.mxu0 0
  %164 = vmatprep.subr.bf16.mxu0 0
  %165 = vmatpush1.bf16.msra.mxu0 0
  %166 = vmatprep.subr.bf16.mxu0 0
  %167 = vmatpush1.bf16.msra.mxu0 0
  %168 = vmatprep.subr.bf16.mxu0 0
  %169 = vmatpush1.bf16.msra.mxu0 0
  %170 = vmatprep.subr.bf16.mxu0 0
  %171 = vmatpush1.bf16.msra.mxu0 0
  %172 = vmatprep.mubr.bf16.mxu0 0
  %173 = vmatmul.mubr.bf16.gmra.mrb[0].mxu0 %v76
  %v174 = vpop.f32.mrb[0].mxu0
  %v175 = vadd.f32 0.0, %v174
  %v176 = vpop.f32.mrb[0].mxu0
  %v177 = vpop.f32.mrb[0].mxu0
  %v178 = vadd.f32 0.0, %v177
  %v179 = vpop.f32.mrb[0].mxu0
  %180 = vmatprep.mubr.bf16.mxu0 0
  %181 = vmatmul.mubr.bf16.gmra.mrb[0].mxu0 %v77
  %v182 = vpop.f32.mrb[0].mxu0
  %v183 = vadd.f32 0.0, %v182
  %v184 = vpop.f32.mrb[0].mxu0
  %v185 = vpop.f32.mrb[0].mxu0
  %v186 = vadd.f32 0.0, %v185
  %v187 = vpop.f32.mrb[0].mxu0
  %188 = vmatprep.mubr.bf16.mxu0 0
  %189 = vmatmul.mubr.bf16.gmra.mrb[0].mxu0 %v78
  %v190 = vpop.f32.mrb[0].mxu0
  %v191 = vadd.f32 0.0, %v190
  %v192 = vpop.f32.mrb[0].mxu0
  %v193 = vpop.f32.mrb[0].mxu0
  %v194 = vadd.f32 0.0, %v193
  %v195 = vpop.f32.mrb[0].mxu0
  %196 = vmatprep.mubr.bf16.mxu0 0
  %197 = vmatmul.mubr.bf16.gmra.mrb[0].mxu0 %v79
  %v198 = vpop.f32.mrb[0].mxu0
  %v199 = vadd.f32 0.0, %v198
  %v200 = vpop.f32.mrb[0].mxu0
  %v201 = vpop.f32.mrb[0].mxu0
  %v202 = vadd.f32 0.0, %v201
  %v203 = vpop.f32.mrb[0].mxu0
  %204 = vmatprep.mubr.bf16.mxu0 0
  %205 = vmatmul.mubr.bf16.gmra.mrb[0].mxu0 %v80
  %v206 = vpop.f32.mrb[0].mxu0
  %v207 = vadd.f32 0.0, %v206
  %v208 = vpop.f32.mrb[0].mxu0
  %v209 = vpop.f32.mrb[0].mxu0
  %v210 = vadd.f32 0.0, %v209
  %v211 = vpop.f32.mrb[0].mxu0
  %212 = vmatprep.mubr.bf16.mxu0 0
  %213 = vmatmul.mubr.bf16.gmra.mrb[0].mxu0 %v81
  %v214 = vpop.f32.mrb[0].mxu0
  %v215 = vadd.f32 0.0, %v214
  %v216 = vpop.f32.mrb[0].mxu0
  %v217 = vpop.f32.mrb[0].mxu0
  %v218 = vadd.f32 0.0, %v217
  %v219 = vpop.f32.mrb[0].mxu0
  %220 = vmatprep.mubr.bf16.mxu0 0
  %221 = vmatmul.mubr.bf16.gmra.mrb[0].mxu0 %v82
  %v222 = vpop.f32.mrb[0].mxu0
  %v223 = vadd.f32 0.0, %v222
  %v224 = vpop.f32.mrb[0].mxu0
  %v225 = vpop.f32.mrb[0].mxu0
  %v226 = vadd.f32 0.0, %v225
  %v227 = vpop.f32.mrb[0].mxu0
  %228 = vmatprep.mubr.bf16.mxu0 0
  %229 = vmatmul.mubr.bf16.gmra.mrb[0].mxu0 %v83
  %v230 = vpop.f32.mrb[0].mxu0
  %v231 = vadd.f32 0.0, %v230
  %v232 = vpop.f32.mrb[0].mxu0
  %v233 = vpop.f32.mrb[0].mxu0
  %v234 = vadd.f32 0.0, %v233
  %v235 = vpop.f32.mrb[0].mxu0
  %236 = vdwg.mxu0
  %v237 = vpack.c.bf16 %v178, %v175
  %v238 = vpack.c.bf16 %v186, %v183
  %v239 = vpack.c.bf16 %v194, %v191
  %v240 = vpack.c.bf16 %v202, %v199
  %v241 = vpack.c.bf16 %v210, %v207
  %v242 = vpack.c.bf16 %v218, %v215
  %v243 = vpack.c.bf16 %v226, %v223
  %v244 = vpack.c.bf16 %v234, %v231
  %v253 = vunpack.c.l.b16 %v237
  %v254 = vunpack.c.h.b16 %v237
  %v255 = vunpack.c.l.b16 %v238
  %v256 = vunpack.c.h.b16 %v238
  %v257 = vunpack.c.l.b16 %v239
  %v258 = vunpack.c.h.b16 %v239
  %v259 = vunpack.c.l.b16 %v240
  %v260 = vunpack.c.h.b16 %v240
  %v261 = vunpack.c.l.b16 %v241
  %v262 = vunpack.c.h.b16 %v241
  %v263 = vunpack.c.l.b16 %v242
  %v264 = vunpack.c.h.b16 %v242
  %v265 = vunpack.c.l.b16 %v243
  %v266 = vunpack.c.h.b16 %v243
  %v267 = vunpack.c.l.b16 %v244
  %v268 = vunpack.c.h.b16 %v244
  %v269 = vpack.c.b16 %v253, %v253
  %v270 = vpack.c.b16 %v254, %v254
  %v271 = vpack.c.b16 %v255, %v255
  %v272 = vpack.c.b16 %v256, %v256
  %v273 = vpack.c.b16 %v257, %v257
  %v274 = vpack.c.b16 %v258, %v258
  %v275 = vpack.c.b16 %v259, %v259
  %v276 = vpack.c.b16 %v260, %v260
  %v277 = vpack.c.b16 %v261, %v261
  %v278 = vpack.c.b16 %v262, %v262
  %v279 = vpack.c.b16 %v263, %v263
  %v280 = vpack.c.b16 %v264, %v264
  %v281 = vpack.c.b16 %v265, %v265
  %v282 = vpack.c.b16 %v266, %v266
  %v283 = vpack.c.b16 %v267, %v267
  %v284 = vpack.c.b16 %v268, %v268
  %301 = vst [vmem:[%s2] sm:$0xf] %v269
  %302 = vst [vmem:[%s2 + $0x4] sm:$0xf] %v270
  %303 = vst [vmem:[%s2 + $0x8] sm:$0xf] %v271
  %304 = vst [vmem:[%s2 + $0xc] sm:$0xf] %v272
  %305 = vst [vmem:[%s2 + $0x10] sm:$0xf] %v273
  %306 = vst [vmem:[%s2 + $0x14] sm:$0xf] %v274
  %307 = vst [vmem:[%s2 + $0x18] sm:$0xf] %v275
  %308 = vst [vmem:[%s2 + $0x1c] sm:$0xf] %v276
  %309 = vst [vmem:[%s2 + $0x20] sm:$0xf] %v277
  %310 = vst [vmem:[%s2 + $0x24] sm:$0xf] %v278
  %311 = vst [vmem:[%s2 + $0x28] sm:$0xf] %v279
  %312 = vst [vmem:[%s2 + $0x2c] sm:$0xf] %v280
  %313 = vst [vmem:[%s2 + $0x30] sm:$0xf] %v281
  %314 = vst [vmem:[%s2 + $0x34] sm:$0xf] %v282
  %315 = vst [vmem:[%s2 + $0x38] sm:$0xf] %v283
  %316 = vst [vmem:[%s2 + $0x3c] sm:$0xf] %v284
  // Predicated region
  $region10: #{gnn_forward.3} parent=0 // pred_check
    _
  $region11: #{gnn_forward.3} parent=0 // pred_check_branch
    %318 = sbr.rel (0) target = $region13
  $region12: #{gnn_forward.3} parent=0 // pred_region
    _
  $region13: #{gnn_forward.3} parent=0 // pred_fallthru
    _
  // Predicated region
  $region14: #{gnn_forward.3} parent=0 // pred_check
    _
  $region15: #{gnn_forward.3} parent=0 // pred_check_branch
    %320 = sbr.rel (0) target = $region17
  $region16: #{gnn_forward.3} parent=0 // pred_region
    _
  $region17: #{gnn_forward.3} parent=0 // pred_fallthru
    _

// kernel: gnn_forward.4
$region0: #{gnn_forward.4}
  #allocation0 [shape = 'u32[]', space=smem, size = 0x4, offset = 0x4, fixed_abs, tag = 'smem constant byte address 0x4 - core index']
  #allocation1 [shape = 'u32[144,128]{1,0:T(1,128)}', space=vmem, size = 0x12000, scoped, tag = 'internal scratch']
  #allocation2 [shape = 'f32[128,128]{1,0:T(8,128)}', space=vmem, size = 0x10000, scoped, tag = 'scratch operand']
  %s0 = inlined_call_operand.vmem [shape: bf16[128,128], index: 0, kind: input, shape index: {}]
  %s1 = inlined_call_operand.vmem [shape: bf16[128,128], index: 1, kind: input, shape index: {}]
  %s2 = inlined_call_operand.vmem [shape: f32[1,128], index: 2, kind: input, shape index: {}]
  %s3 = inlined_call_operand.vmem [shape: bf16[128,128], index: 3, kind: input, shape index: {}]
  %s4 = inlined_call_operand.vmem [shape: bf16[128,128], index: 4, kind: output, shape index: {}]
  %s5 = sld [smem:[#allocation0]]
  $region34: #{gnn_forward.4} parent=0
    _
  %s7 = ssub.s32 1, %s5
  %s8 = scalar_select 0, %s7, %s5
  // Predicated region
  $region2: #{gnn_forward.4} parent=0 // pred_check
    _
  $region3: #{gnn_forward.4} parent=0 // pred_check_branch
    %10 = sbr.rel (0) target = $region5
  $region4: #{gnn_forward.4} parent=0 // pred_region
    _
  $region5: #{gnn_forward.4} parent=0 // pred_fallthru
    _
  // Predicated region
  $region6: #{gnn_forward.4} parent=0 // pred_check
    _
  $region7: #{gnn_forward.4} parent=0 // pred_check_branch
    %12 = sbr.rel (0) target = $region9
  $region8: #{gnn_forward.4} parent=0 // pred_region
    _
  $region9: #{gnn_forward.4} parent=0 // pred_fallthru
    _
  // Predicated region
  $region10: #{gnn_forward.4} parent=0 // pred_check
    _
  $region11: #{gnn_forward.4} parent=0 // pred_check_branch
    %14 = sbr.rel (0) target = $region13
  $region12: #{gnn_forward.4} parent=0 // pred_region
    _
  $region13: #{gnn_forward.4} parent=0 // pred_fallthru
    _
  // Predicated region
  $region14: #{gnn_forward.4} parent=0 // pred_check
    _
  $region15: #{gnn_forward.4} parent=0 // pred_check_branch
    %16 = sbr.rel (0) target = $region17
  $region16: #{gnn_forward.4} parent=0 // pred_region
    _
  $region17: #{gnn_forward.4} parent=0 // pred_fallthru
    _
  %p18 = scmp.eq.s32.totalorder 0, 0
  // Predicated region
  $region18: #{gnn_forward.4} parent=0 // pred_check
    %p19 = pneg %p18
  $region19: #{gnn_forward.4} parent=0 // pred_check_branch
    %21 = sbr.rel (%p19) target = $region21
  $region20: #{gnn_forward.4} parent=0 // pred_region
    %22 = vst [vmem:[#allocation2] sm:$0xff] 0.0
    %23 = vst [vmem:[#allocation2 + $0x8] sm:$0xff] 0.0
    %24 = vst [vmem:[#allocation2 + $0x10] sm:$0xff] 0.0
    %25 = vst [vmem:[#allocation2 + $0x18] sm:$0xff] 0.0
    %26 = vst [vmem:[#allocation2 + $0x20] sm:$0xff] 0.0
    %27 = vst [vmem:[#allocation2 + $0x28] sm:$0xff] 0.0
    %28 = vst [vmem:[#allocation2 + $0x30] sm:$0xff] 0.0
    %29 = vst [vmem:[#allocation2 + $0x38] sm:$0xff] 0.0
    %30 = vst [vmem:[#allocation2 + $0x40] sm:$0xff] 0.0
    %31 = vst [vmem:[#allocation2 + $0x48] sm:$0xff] 0.0
    %32 = vst [vmem:[#allocation2 + $0x50] sm:$0xff] 0.0
    %33 = vst [vmem:[#allocation2 + $0x58] sm:$0xff] 0.0
    %34 = vst [vmem:[#allocation2 + $0x60] sm:$0xff] 0.0
    %35 = vst [vmem:[#allocation2 + $0x68] sm:$0xff] 0.0
    %36 = vst [vmem:[#allocation2 + $0x70] sm:$0xff] 0.0
    %37 = vst [vmem:[#allocation2 + $0x78] sm:$0xff] 0.0
  $region21: #{gnn_forward.4} parent=0 // pred_fallthru
    _
  %s38 = smul.u32 0, 128
  %s39 = sshra.s32 %s38, 3
  %s40 = sand.u32 %s38, 7
  %s41 = smul.addr %s39, 4
  %s42 = scalar_lea.vmem %s1, %s41
  %v43 = vld [vmem:[%s42] sm:$0xf]
  %v44 = vld [vmem:[%s42 + $0x4] sm:$0xf]
  %v45 = vld [vmem:[%s42 + $0x8] sm:$0xf]
  %v46 = vld [vmem:[%s42 + $0xc] sm:$0xf]
  %v47 = vld [vmem:[%s42 + $0x10] sm:$0xf]
  %v48 = vld [vmem:[%s42 + $0x14] sm:$0xf]
  %v49 = vld [vmem:[%s42 + $0x18] sm:$0xf]
  %v50 = vld [vmem:[%s42 + $0x1c] sm:$0xf]
  %v51 = vld [vmem:[%s42 + $0x20] sm:$0xf]
  %v52 = vld [vmem:[%s42 + $0x24] sm:$0xf]
  %v53 = vld [vmem:[%s42 + $0x28] sm:$0xf]
  %v54 = vld [vmem:[%s42 + $0x2c] sm:$0xf]
  %v55 = vld [vmem:[%s42 + $0x30] sm:$0xf]
  %v56 = vld [vmem:[%s42 + $0x34] sm:$0xf]
  %v57 = vld [vmem:[%s42 + $0x38] sm:$0xf]
  %v58 = vld [vmem:[%s42 + $0x3c] sm:$0xf]
  %v59 = vld [vmem:[#allocation2] sm:$0xff]
  %v60 = vld [vmem:[#allocation2 + $0x8] sm:$0xff]
  %v61 = vld [vmem:[#allocation2 + $0x10] sm:$0xff]
  %v62 = vld [vmem:[#allocation2 + $0x18] sm:$0xff]
  %v63 = vld [vmem:[#allocation2 + $0x20] sm:$0xff]
  %v64 = vld [vmem:[#allocation2 + $0x28] sm:$0xff]
  %v65 = vld [vmem:[#allocation2 + $0x30] sm:$0xff]
  %v66 = vld [vmem:[#allocation2 + $0x38] sm:$0xff]
  %v67 = vld [vmem:[#allocation2 + $0x40] sm:$0xff]
  %v68 = vld [vmem:[#allocation2 + $0x48] sm:$0xff]
  %v69 = vld [vmem:[#allocation2 + $0x50] sm:$0xff]
  %v70 = vld [vmem:[#allocation2 + $0x58] sm:$0xff]
  %v71 = vld [vmem:[#allocation2 + $0x60] sm:$0xff]
  %v72 = vld [vmem:[#allocation2 + $0x68] sm:$0xff]
  %v73 = vld [vmem:[#allocation2 + $0x70] sm:$0xff]
  %v74 = vld [vmem:[#allocation2 + $0x78] sm:$0xff]
  %v75 = vld [vmem:[%s0] sm:$0xf]
  %v76 = vld [vmem:[%s0 + $0x4] sm:$0xf]
  %v77 = vld [vmem:[%s0 + $0x8] sm:$0xf]
  %v78 = vld [vmem:[%s0 + $0xc] sm:$0xf]
  %v79 = vld [vmem:[%s0 + $0x10] sm:$0xf]
  %v80 = vld [vmem:[%s0 + $0x14] sm:$0xf]
  %v81 = vld [vmem:[%s0 + $0x18] sm:$0xf]
  %v82 = vld [vmem:[%s0 + $0x1c] sm:$0xf]
  %v83 = vld [vmem:[%s0 + $0x20] sm:$0xf]
  %v84 = vld [vmem:[%s0 + $0x24] sm:$0xf]
  %v85 = vld [vmem:[%s0 + $0x28] sm:$0xf]
  %v86 = vld [vmem:[%s0 + $0x2c] sm:$0xf]
  %v87 = vld [vmem:[%s0 + $0x30] sm:$0xf]
  %v88 = vld [vmem:[%s0 + $0x34] sm:$0xf]
  %v89 = vld [vmem:[%s0 + $0x38] sm:$0xf]
  %v90 = vld [vmem:[%s0 + $0x3c] sm:$0xf]
  %v107 = vunpack.c.l.b16 %v75
  %v108 = vunpack.c.l.b16 %v76
  %v109 = vunpack.c.l.b16 %v77
  %v110 = vunpack.c.l.b16 %v78
  %v111 = vunpack.c.l.b16 %v79
  %v112 = vunpack.c.l.b16 %v80
  %v113 = vunpack.c.l.b16 %v81
  %v114 = vunpack.c.l.b16 %v82
  %v115 = vunpack.c.l.b16 %v83
  %v116 = vunpack.c.l.b16 %v84
  %v117 = vunpack.c.l.b16 %v85
  %v118 = vunpack.c.l.b16 %v86
  %v119 = vunpack.c.l.b16 %v87
  %v120 = vunpack.c.l.b16 %v88
  %v121 = vunpack.c.l.b16 %v89
  %v122 = vunpack.c.l.b16 %v90
  %v123 = vpack.c.b16 %v108, %v107
  %v124 = vpack.c.b16 %v110, %v109
  %v125 = vpack.c.b16 %v112, %v111
  %v126 = vpack.c.b16 %v114, %v113
  %v127 = vpack.c.b16 %v116, %v115
  %v128 = vpack.c.b16 %v118, %v117
  %v129 = vpack.c.b16 %v120, %v119
  %v130 = vpack.c.b16 %v122, %v121
  %v155 = vunpack.c.l.b16 %v43
  %v156 = vunpack.c.l.b16 %v44
  %v157 = vunpack.c.l.b16 %v45
  %v158 = vunpack.c.l.b16 %v46
  %v159 = vunpack.c.l.b16 %v47
  %v160 = vunpack.c.l.b16 %v48
  %v161 = vunpack.c.l.b16 %v49
  %v162 = vunpack.c.l.b16 %v50
  %v163 = vunpack.c.l.b16 %v51
  %v164 = vunpack.c.l.b16 %v52
  %v165 = vunpack.c.l.b16 %v53
  %v166 = vunpack.c.l.b16 %v54
  %v167 = vunpack.c.l.b16 %v55
  %v168 = vunpack.c.l.b16 %v56
  %v169 = vunpack.c.l.b16 %v57
  %v170 = vunpack.c.l.b16 %v58
  %v171 = vpack.c.b16 %v156, %v155
  %v172 = vpack.c.b16 %v158, %v157
  %v173 = vpack.c.b16 %v160, %v159
  %v174 = vpack.c.b16 %v162, %v161
  %v175 = vpack.c.b16 %v164, %v163
  %v176 = vpack.c.b16 %v166, %v165
  %v177 = vpack.c.b16 %v168, %v167
  %v178 = vpack.c.b16 %v170, %v169
  %187 = vmatprep.subr.bf16.mxu0 0
  %188 = vmatpush1.bf16.msra.mxu0 %v171
  %189 = vmatprep.subr.bf16.mxu0 0
  %190 = vmatpush1.bf16.msra.mxu0 %v172
  %191 = vmatprep.subr.bf16.mxu0 0
  %192 = vmatpush1.bf16.msra.mxu0 %v173
  %193 = vmatprep.subr.bf16.mxu0 0
  %194 = vmatpush1.bf16.msra.mxu0 %v174
  %195 = vmatprep.subr.bf16.mxu0 0
  %196 = vmatpush1.bf16.msra.mxu0 %v175
  %197 = vmatprep.subr.bf16.mxu0 0
  %198 = vmatpush1.bf16.msra.mxu0 %v176
  %199 = vmatprep.subr.bf16.mxu0 0
  %200 = vmatpush1.bf16.msra.mxu0 %v177
  %201 = vmatprep.subr.bf16.mxu0 0
  %202 = vmatpush1.bf16.msra.mxu0 %v178
  %203 = vmatprep.subr.bf16.mxu0 0
  %204 = vmatpush1.bf16.msra.mxu0 0
  %205 = vmatprep.subr.bf16.mxu0 0
  %206 = vmatpush1.bf16.msra.mxu0 0
  %207 = vmatprep.subr.bf16.mxu0 0
  %208 = vmatpush1.bf16.msra.mxu0 0
  %209 = vmatprep.subr.bf16.mxu0 0
  %210 = vmatpush1.bf16.msra.mxu0 0
  %211 = vmatprep.subr.bf16.mxu0 0
  %212 = vmatpush1.bf16.msra.mxu0 0
  %213 = vmatprep.subr.bf16.mxu0 0
  %214 = vmatpush1.bf16.msra.mxu0 0
  %215 = vmatprep.subr.bf16.mxu0 0
  %216 = vmatpush1.bf16.msra.mxu0 0
  %217 = vmatprep.subr.bf16.mxu0 0
  %218 = vmatpush1.bf16.msra.mxu0 0
  %219 = vmatprep.mubr.bf16.mxu0 0
  %220 = vmatmul.mubr.bf16.gmra.mrb[0].mxu0 %v123
  %v221 = vpop.f32.mrb[0].mxu0
  %v222 = vadd.f32 0.0, %v221
  %v223 = vpop.f32.mrb[0].mxu0
  %v224 = vpop.f32.mrb[0].mxu0
  %v225 = vadd.f32 0.0, %v224
  %v226 = vpop.f32.mrb[0].mxu0
  %227 = vmatprep.mubr.bf16.mxu0 0
  %228 = vmatmul.mubr.bf16.gmra.mrb[0].mxu0 %v124
  %v229 = vpop.f32.mrb[0].mxu0
  %v230 = vadd.f32 0.0, %v229
  %v231 = vpop.f32.mrb[0].mxu0
  %v232 = vpop.f32.mrb[0].mxu0
  %v233 = vadd.f32 0.0, %v232
  %v234 = vpop.f32.mrb[0].mxu0
  %235 = vmatprep.mubr.bf16.mxu0 0
  %236 = vmatmul.mubr.bf16.gmra.mrb[0].mxu0 %v125
  %v237 = vpop.f32.mrb[0].mxu0
  %v238 = vadd.f32 0.0, %v237
  %v239 = vpop.f32.mrb[0].mxu0
  %v240 = vpop.f32.mrb[0].mxu0
  %v241 = vadd.f32 0.0, %v240
  %v242 = vpop.f32.mrb[0].mxu0
  %243 = vmatprep.mubr.bf16.mxu0 0
  %244 = vmatmul.mubr.bf16.gmra.mrb[0].mxu0 %v126
  %v245 = vpop.f32.mrb[0].mxu0
  %v246 = vadd.f32 0.0, %v245
  %v247 = vpop.f32.mrb[0].mxu0
  %v248 = vpop.f32.mrb[0].mxu0
  %v249 = vadd.f32 0.0, %v248
  %v250 = vpop.f32.mrb[0].mxu0
  %251 = vmatprep.mubr.bf16.mxu0 0
  %252 = vmatmul.mubr.bf16.gmra.mrb[0].mxu0 %v127
  %v253 = vpop.f32.mrb[0].mxu0
  %v254 = vadd.f32 0.0, %v253
  %v255 = vpop.f32.mrb[0].mxu0
  %v256 = vpop.f32.mrb[0].mxu0
  %v257 = vadd.f32 0.0, %v256
  %v258 = vpop.f32.mrb[0].mxu0
  %259 = vmatprep.mubr.bf16.mxu0 0
  %260 = vmatmul.mubr.bf16.gmra.mrb[0].mxu0 %v128
  %v261 = vpop.f32.mrb[0].mxu0
  %v262 = vadd.f32 0.0, %v261
  %v263 = vpop.f32.mrb[0].mxu0
  %v264 = vpop.f32.mrb[0].mxu0
  %v265 = vadd.f32 0.0, %v264
  %v266 = vpop.f32.mrb[0].mxu0
  %267 = vmatprep.mubr.bf16.mxu0 0
  %268 = vmatmul.mubr.bf16.gmra.mrb[0].mxu0 %v129
  %v269 = vpop.f32.mrb[0].mxu0
  %v270 = vadd.f32 0.0, %v269
  %v271 = vpop.f32.mrb[0].mxu0
  %v272 = vpop.f32.mrb[0].mxu0
  %v273 = vadd.f32 0.0, %v272
  %v274 = vpop.f32.mrb[0].mxu0
  %275 = vmatprep.mubr.bf16.mxu0 0
  %276 = vmatmul.mubr.bf16.gmra.mrb[0].mxu0 %v130
  %v277 = vpop.f32.mrb[0].mxu0
  %v278 = vadd.f32 0.0, %v277
  %v279 = vpop.f32.mrb[0].mxu0
  %v280 = vpop.f32.mrb[0].mxu0
  %v281 = vadd.f32 0.0, %v280
  %v282 = vpop.f32.mrb[0].mxu0
  %283 = vdwg.mxu0
  %v284 = vadd.f32 %v59, %v222
  %v285 = vadd.f32 %v60, %v225
  %v286 = vadd.f32 %v61, %v230
  %v287 = vadd.f32 %v62, %v233
  %v288 = vadd.f32 %v63, %v238
  %v289 = vadd.f32 %v64, %v241
  %v290 = vadd.f32 %v65, %v246
  %v291 = vadd.f32 %v66, %v249
  %v292 = vadd.f32 %v67, %v254
  %v293 = vadd.f32 %v68, %v257
  %v294 = vadd.f32 %v69, %v262
  %v295 = vadd.f32 %v70, %v265
  %v296 = vadd.f32 %v71, %v270
  %v297 = vadd.f32 %v72, %v273
  %v298 = vadd.f32 %v73, %v278
  %v299 = vadd.f32 %v74, %v281
  %300 = vst [vmem:[#allocation2] sm:$0xff] %v284
  %301 = vst [vmem:[#allocation2 + $0x8] sm:$0xff] %v285
  %302 = vst [vmem:[#allocation2 + $0x10] sm:$0xff] %v286
  %303 = vst [vmem:[#allocation2 + $0x18] sm:$0xff] %v287
  %304 = vst [vmem:[#allocation2 + $0x20] sm:$0xff] %v288
  %305 = vst [vmem:[#allocation2 + $0x28] sm:$0xff] %v289
  %306 = vst [vmem:[#allocation2 + $0x30] sm:$0xff] %v290
  %307 = vst [vmem:[#allocation2 + $0x38] sm:$0xff] %v291
  %308 = vst [vmem:[#allocation2 + $0x40] sm:$0xff] %v292
  %309 = vst [vmem:[#allocation2 + $0x48] sm:$0xff] %v293
  %310 = vst [vmem:[#allocation2 + $0x50] sm:$0xff] %v294
  %311 = vst [vmem:[#allocation2 + $0x58] sm:$0xff] %v295
  %312 = vst [vmem:[#allocation2 + $0x60] sm:$0xff] %v296
  %313 = vst [vmem:[#allocation2 + $0x68] sm:$0xff] %v297
  %314 = vst [vmem:[#allocation2 + $0x70] sm:$0xff] %v298
  %315 = vst [vmem:[#allocation2 + $0x78] sm:$0xff] %v299
  // Predicated region
  $region22: #{gnn_forward.4} parent=0 // pred_check
    %p316 = pneg %p18
  $region23: #{gnn_forward.4} parent=0 // pred_check_branch
    %318 = sbr.rel (%p316) target = $region25
  $region24: #{gnn_forward.4} parent=0 // pred_region
    %v319 = vld [vmem:[#allocation2] sm:$0xff]
    %v320 = vld [vmem:[#allocation2 + $0x8] sm:$0xff]
    %v321 = vld [vmem:[#allocation2 + $0x10] sm:$0xff]
    %v322 = vld [vmem:[#allocation2 + $0x18] sm:$0xff]
    %v323 = vld [vmem:[#allocation2 + $0x20] sm:$0xff]
    %v324 = vld [vmem:[#allocation2 + $0x28] sm:$0xff]
    %v325 = vld [vmem:[#allocation2 + $0x30] sm:$0xff]
    %v326 = vld [vmem:[#allocation2 + $0x38] sm:$0xff]
    %v327 = vld [vmem:[#allocation2 + $0x40] sm:$0xff]
    %v328 = vld [vmem:[#allocation2 + $0x48] sm:$0xff]
    %v329 = vld [vmem:[#allocation2 + $0x50] sm:$0xff]
    %v330 = vld [vmem:[#allocation2 + $0x58] sm:$0xff]
    %v331 = vld [vmem:[#allocation2 + $0x60] sm:$0xff]
    %v332 = vld [vmem:[#allocation2 + $0x68] sm:$0xff]
    %v333 = vld [vmem:[#allocation2 + $0x70] sm:$0xff]
    %v334 = vld [vmem:[#allocation2 + $0x78] sm:$0xff]
    %v335 = vld [vmem:[%s2] sm:$0x1]
    %v337 = vlaneseq
    %v338 = vshrl.u32 %v337, 7
    %v339 = vsub.s32 0, %v338
    %v340 = vrot.slane %v335, %v339
    %v342 = vadd.f32 %v319, %v340
    %v343 = vadd.f32 %v320, %v340
    %v344 = vadd.f32 %v321, %v340
    %v345 = vadd.f32 %v322, %v340
    %v346 = vadd.f32 %v323, %v340
    %v347 = vadd.f32 %v324, %v340
    %v348 = vadd.f32 %v325, %v340
    %v349 = vadd.f32 %v326, %v340
    %v350 = vadd.f32 %v327, %v340
    %v351 = vadd.f32 %v328, %v340
    %v352 = vadd.f32 %v329, %v340
    %v353 = vadd.f32 %v330, %v340
    %v354 = vadd.f32 %v331, %v340
    %v355 = vadd.f32 %v332, %v340
    %v356 = vadd.f32 %v333, %v340
    %v357 = vadd.f32 %v334, %v340
    %v358 = vmax.f32 %v342, 0.0
    %v359 = vmax.f32 %v343, 0.0
    %v360 = vmax.f32 %v344, 0.0
    %v361 = vmax.f32 %v345, 0.0
    %v362 = vmax.f32 %v346, 0.0
    %v363 = vmax.f32 %v347, 0.0
    %v364 = vmax.f32 %v348, 0.0
    %v365 = vmax.f32 %v349, 0.0
    %v366 = vmax.f32 %v350, 0.0
    %v367 = vmax.f32 %v351, 0.0
    %v368 = vmax.f32 %v352, 0.0
    %v369 = vmax.f32 %v353, 0.0
    %v370 = vmax.f32 %v354, 0.0
    %v371 = vmax.f32 %v355, 0.0
    %v372 = vmax.f32 %v356, 0.0
    %v373 = vmax.f32 %v357, 0.0
    %v374 = vpack.c.bf16 %v359, %v358
    %v375 = vpack.c.bf16 %v361, %v360
    %v376 = vpack.c.bf16 %v363, %v362
    %v377 = vpack.c.bf16 %v365, %v364
    %v378 = vpack.c.bf16 %v367, %v366
    %v379 = vpack.c.bf16 %v369, %v368
    %v380 = vpack.c.bf16 %v371, %v370
    %v381 = vpack.c.bf16 %v373, %v372
    %v382 = vld [vmem:[%s3] sm:$0xf]
    %v383 = vld [vmem:[%s3 + $0x4] sm:$0xf]
    %v384 = vld [vmem:[%s3 + $0x8] sm:$0xf]
    %v385 = vld [vmem:[%s3 + $0xc] sm:$0xf]
    %v386 = vld [vmem:[%s3 + $0x10] sm:$0xf]
    %v387 = vld [vmem:[%s3 + $0x14] sm:$0xf]
    %v388 = vld [vmem:[%s3 + $0x18] sm:$0xf]
    %v389 = vld [vmem:[%s3 + $0x1c] sm:$0xf]
    %v390 = vld [vmem:[%s3 + $0x20] sm:$0xf]
    %v391 = vld [vmem:[%s3 + $0x24] sm:$0xf]
    %v392 = vld [vmem:[%s3 + $0x28] sm:$0xf]
    %v393 = vld [vmem:[%s3 + $0x2c] sm:$0xf]
    %v394 = vld [vmem:[%s3 + $0x30] sm:$0xf]
    %v395 = vld [vmem:[%s3 + $0x34] sm:$0xf]
    %v396 = vld [vmem:[%s3 + $0x38] sm:$0xf]
    %v397 = vld [vmem:[%s3 + $0x3c] sm:$0xf]
    %v414 = vunpack.c.l.b16 %v382
    %v415 = vunpack.c.l.b16 %v383
    %v416 = vunpack.c.l.b16 %v384
    %v417 = vunpack.c.l.b16 %v385
    %v418 = vunpack.c.l.b16 %v386
    %v419 = vunpack.c.l.b16 %v387
    %v420 = vunpack.c.l.b16 %v388
    %v421 = vunpack.c.l.b16 %v389
    %v422 = vunpack.c.l.b16 %v390
    %v423 = vunpack.c.l.b16 %v391
    %v424 = vunpack.c.l.b16 %v392
    %v425 = vunpack.c.l.b16 %v393
    %v426 = vunpack.c.l.b16 %v394
    %v427 = vunpack.c.l.b16 %v395
    %v428 = vunpack.c.l.b16 %v396
    %v429 = vunpack.c.l.b16 %v397
    %v430 = vpack.c.b16 %v415, %v414
    %v431 = vpack.c.b16 %v417, %v416
    %v432 = vpack.c.b16 %v419, %v418
    %v433 = vpack.c.b16 %v421, %v420
    %v434 = vpack.c.b16 %v423, %v422
    %v435 = vpack.c.b16 %v425, %v424
    %v436 = vpack.c.b16 %v427, %v426
    %v437 = vpack.c.b16 %v429, %v428
    %446 = vmatprep.subr.bf16.mxu0 0
    %447 = vmatpush1.bf16.msra.mxu0 %v430
    %448 = vmatprep.subr.bf16.mxu0 0
    %449 = vmatpush1.bf16.msra.mxu0 %v431
    %450 = vmatprep.subr.bf16.mxu0 0
    %451 = vmatpush1.bf16.msra.mxu0 %v432
    %452 = vmatprep.subr.bf16.mxu0 0
    %453 = vmatpush1.bf16.msra.mxu0 %v433
    %454 = vmatprep.subr.bf16.mxu0 0
    %455 = vmatpush1.bf16.msra.mxu0 %v434
    %456 = vmatprep.subr.bf16.mxu0 0
    %457 = vmatpush1.bf16.msra.mxu0 %v435
    %458 = vmatprep.subr.bf16.mxu0 0
    %459 = vmatpush1.bf16.msra.mxu0 %v436
    %460 = vmatprep.subr.bf16.mxu0 0
    %461 = vmatpush1.bf16.msra.mxu0 %v437
    %462 = vmatprep.subr.bf16.mxu0 0
    %463 = vmatpush1.bf16.msra.mxu0 0
    %464 = vmatprep.subr.bf16.mxu0 0
    %465 = vmatpush1.bf16.msra.mxu0 0
    %466 = vmatprep.subr.bf16.mxu0 0
    %467 = vmatpush1.bf16.msra.mxu0 0
    %468 = vmatprep.subr.bf16.mxu0 0
    %469 = vmatpush1.bf16.msra.mxu0 0
    %470 = vmatprep.subr.bf16.mxu0 0
    %471 = vmatpush1.bf16.msra.mxu0 0
    %472 = vmatprep.subr.bf16.mxu0 0
    %473 = vmatpush1.bf16.msra.mxu0 0
    %474 = vmatprep.subr.bf16.mxu0 0
    %475 = vmatpush1.bf16.msra.mxu0 0
    %476 = vmatprep.subr.bf16.mxu0 0
    %477 = vmatpush1.bf16.msra.mxu0 0
    %478 = vmatprep.mubr.bf16.mxu0 0
    %479 = vmatmul.mubr.bf16.gmra.mrb[0].mxu0 %v374
    %v480 = vpop.f32.mrb[0].mxu0
    %v481 = vadd.f32 0.0, %v480
    %v482 = vpop.f32.mrb[0].mxu0
    %v483 = vpop.f32.mrb[0].mxu0
    %v484 = vadd.f32 0.0, %v483
    %v485 = vpop.f32.mrb[0].mxu0
    %486 = vmatprep.mubr.bf16.mxu0 0
    %487 = vmatmul.mubr.bf16.gmra.mrb[0].mxu0 %v375
    %v488 = vpop.f32.mrb[0].mxu0
    %v489 = vadd.f32 0.0, %v488
    %v490 = vpop.f32.mrb[0].mxu0
    %v491 = vpop.f32.mrb[0].mxu0
    %v492 = vadd.f32 0.0, %v491
    %v493 = vpop.f32.mrb[0].mxu0
    %494 = vmatprep.mubr.bf16.mxu0 0
    %495 = vmatmul.mubr.bf16.gmra.mrb[0].mxu0 %v376
    %v496 = vpop.f32.mrb[0].mxu0
    %v497 = vadd.f32 0.0, %v496
    %v498 = vpop.f32.mrb[0].mxu0
    %v499 = vpop.f32.mrb[0].mxu0
    %v500 = vadd.f32 0.0, %v499
    %v501 = vpop.f32.mrb[0].mxu0
    %502 = vmatprep.mubr.bf16.mxu0 0
    %503 = vmatmul.mubr.bf16.gmra.mrb[0].mxu0 %v377
    %v504 = vpop.f32.mrb[0].mxu0
    %v505 = vadd.f32 0.0, %v504
    %v506 = vpop.f32.mrb[0].mxu0
    %v507 = vpop.f32.mrb[0].mxu0
    %v508 = vadd.f32 0.0, %v507
    %v509 = vpop.f32.mrb[0].mxu0
    %510 = vmatprep.mubr.bf16.mxu0 0
    %511 = vmatmul.mubr.bf16.gmra.mrb[0].mxu0 %v378
    %v512 = vpop.f32.mrb[0].mxu0
    %v513 = vadd.f32 0.0, %v512
    %v514 = vpop.f32.mrb[0].mxu0
    %v515 = vpop.f32.mrb[0].mxu0
    %v516 = vadd.f32 0.0, %v515
    %v517 = vpop.f32.mrb[0].mxu0
    %518 = vmatprep.mubr.bf16.mxu0 0
    %519 = vmatmul.mubr.bf16.gmra.mrb[0].mxu0 %v379
    %v520 = vpop.f32.mrb[0].mxu0
    %v521 = vadd.f32 0.0, %v520
    %v522 = vpop.f32.mrb[0].mxu0
    %v523 = vpop.f32.mrb[0].mxu0
    %v524 = vadd.f32 0.0, %v523
    %v525 = vpop.f32.mrb[0].mxu0
    %526 = vmatprep.mubr.bf16.mxu0 0
    %527 = vmatmul.mubr.bf16.gmra.mrb[0].mxu0 %v380
    %v528 = vpop.f32.mrb[0].mxu0
    %v529 = vadd.f32 0.0, %v528
    %v530 = vpop.f32.mrb[0].mxu0
    %v531 = vpop.f32.mrb[0].mxu0
    %v532 = vadd.f32 0.0, %v531
    %v533 = vpop.f32.mrb[0].mxu0
    %534 = vmatprep.mubr.bf16.mxu0 0
    %535 = vmatmul.mubr.bf16.gmra.mrb[0].mxu0 %v381
    %v536 = vpop.f32.mrb[0].mxu0
    %v537 = vadd.f32 0.0, %v536
    %v538 = vpop.f32.mrb[0].mxu0
    %v539 = vpop.f32.mrb[0].mxu0
    %v540 = vadd.f32 0.0, %v539
    %v541 = vpop.f32.mrb[0].mxu0
    %542 = vdwg.mxu0
    %v543 = vpack.c.bf16 %v484, %v481
    %v544 = vpack.c.bf16 %v492, %v489
    %v545 = vpack.c.bf16 %v500, %v497
    %v546 = vpack.c.bf16 %v508, %v505
    %v547 = vpack.c.bf16 %v516, %v513
    %v548 = vpack.c.bf16 %v524, %v521
    %v549 = vpack.c.bf16 %v532, %v529
    %v550 = vpack.c.bf16 %v540, %v537
    %v559 = vunpack.c.l.b16 %v543
    %v560 = vunpack.c.h.b16 %v543
    %v561 = vunpack.c.l.b16 %v544
    %v562 = vunpack.c.h.b16 %v544
    %v563 = vunpack.c.l.b16 %v545
    %v564 = vunpack.c.h.b16 %v545
    %v565 = vunpack.c.l.b16 %v546
    %v566 = vunpack.c.h.b16 %v546
    %v567 = vunpack.c.l.b16 %v547
    %v568 = vunpack.c.h.b16 %v547
    %v569 = vunpack.c.l.b16 %v548
    %v570 = vunpack.c.h.b16 %v548
    %v571 = vunpack.c.l.b16 %v549
    %v572 = vunpack.c.h.b16 %v549
    %v573 = vunpack.c.l.b16 %v550
    %v574 = vunpack.c.h.b16 %v550
    %v575 = vpack.c.b16 %v559, %v559
    %v576 = vpack.c.b16 %v560, %v560
    %v577 = vpack.c.b16 %v561, %v561
    %v578 = vpack.c.b16 %v562, %v562
    %v579 = vpack.c.b16 %v563, %v563
    %v580 = vpack.c.b16 %v564, %v564
    %v581 = vpack.c.b16 %v565, %v565
    %v582 = vpack.c.b16 %v566, %v566
    %v583 = vpack.c.b16 %v567, %v567
    %v584 = vpack.c.b16 %v568, %v568
    %v585 = vpack.c.b16 %v569, %v569
    %v586 = vpack.c.b16 %v570, %v570
    %v587 = vpack.c.b16 %v571, %v571
    %v588 = vpack.c.b16 %v572, %v572
    %v589 = vpack.c.b16 %v573, %v573
    %v590 = vpack.c.b16 %v574, %v574
    %607 = vst [vmem:[%s4] sm:$0xf] %v575
    %608 = vst [vmem:[%s4 + $0x4] sm:$0xf] %v576
    %609 = vst [vmem:[%s4 + $0x8] sm:$0xf] %v577
    %610 = vst [vmem:[%s4 + $0xc] sm:$0xf] %v578
    %611 = vst [vmem:[%s4 + $0x10] sm:$0xf] %v579
    %612 = vst [vmem:[%s4 + $0x14] sm:$0xf] %v580
    %613 = vst [vmem:[%s4 + $0x18] sm:$0xf] %v581
    %614 = vst [vmem:[%s4 + $0x1c] sm:$0xf] %v582
    %615 = vst [vmem:[%s4 + $0x20] sm:$0xf] %v583
    %616 = vst [vmem:[%s4 + $0x24] sm:$0xf] %v584
    %617 = vst [vmem:[%s4 + $0x28] sm:$0xf] %v585
    %618 = vst [vmem:[%s4 + $0x2c] sm:$0xf] %v586
    %619 = vst [vmem:[%s4 + $0x30] sm:$0xf] %v587
    %620 = vst [vmem:[%s4 + $0x34] sm:$0xf] %v588
    %621 = vst [vmem:[%s4 + $0x38] sm:$0xf] %v589
    %622 = vst [vmem:[%s4 + $0x3c] sm:$0xf] %v590
  $region25: #{gnn_forward.4} parent=0 // pred_fallthru
    _
  // Predicated region
  $region26: #{gnn_forward.4} parent=0 // pred_check
    _
  $region27: #{gnn_forward.4} parent=0 // pred_check_branch
    %624 = sbr.rel (0) target = $region29
  $region28: #{gnn_forward.4} parent=0 // pred_region
    _
  $region29: #{gnn_forward.4} parent=0 // pred_fallthru
    _
  // Predicated region
  $region30: #{gnn_forward.4} parent=0 // pred_check
    _
  $region31: #{gnn_forward.4} parent=0 // pred_check_branch
    %626 = sbr.rel (0) target = $region33
  $region32: #{gnn_forward.4} parent=0 // pred_region
    _
  $region33: #{gnn_forward.4} parent=0 // pred_fallthru
    _

// kernel: gnn_forward.5
$region0: #{gnn_forward.5}
  #allocation0 [shape = 'u32[]', space=smem, size = 0x4, offset = 0x4, fixed_abs, tag = 'smem constant byte address 0x4 - core index']
  #allocation1 [shape = 'u32[144,128]{1,0:T(1,128)}', space=vmem, size = 0x12000, scoped, tag = 'internal scratch']
  #allocation2 [shape = 'f32[128,128]{1,0:T(8,128)}', space=vmem, size = 0x10000, scoped, tag = 'scratch operand']
  %s0 = inlined_call_operand.vmem [shape: bf16[128,128], index: 0, kind: input, shape index: {}]
  %s1 = inlined_call_operand.vmem [shape: bf16[128,128], index: 1, kind: input, shape index: {}]
  %s2 = inlined_call_operand.vmem [shape: f32[1,128], index: 2, kind: input, shape index: {}]
  %s3 = inlined_call_operand.vmem [shape: f32[128,128], index: 3, kind: output, shape index: {}]
  %s4 = sld [smem:[#allocation0]]
  $region30: #{gnn_forward.5} parent=0
    _
  %s6 = ssub.s32 1, %s4
  %s7 = scalar_select 0, %s6, %s4
  // Predicated region
  $region2: #{gnn_forward.5} parent=0 // pred_check
    _
  $region3: #{gnn_forward.5} parent=0 // pred_check_branch
    %9 = sbr.rel (0) target = $region5
  $region4: #{gnn_forward.5} parent=0 // pred_region
    _
  $region5: #{gnn_forward.5} parent=0 // pred_fallthru
    _
  // Predicated region
  $region6: #{gnn_forward.5} parent=0 // pred_check
    _
  $region7: #{gnn_forward.5} parent=0 // pred_check_branch
    %11 = sbr.rel (0) target = $region9
  $region8: #{gnn_forward.5} parent=0 // pred_region
    _
  $region9: #{gnn_forward.5} parent=0 // pred_fallthru
    _
  // Predicated region
  $region10: #{gnn_forward.5} parent=0 // pred_check
    _
  $region11: #{gnn_forward.5} parent=0 // pred_check_branch
    %13 = sbr.rel (0) target = $region13
  $region12: #{gnn_forward.5} parent=0 // pred_region
    _
  $region13: #{gnn_forward.5} parent=0 // pred_fallthru
    _
  %p15 = scmp.eq.s32.totalorder 0, 0
  // Predicated region
  $region14: #{gnn_forward.5} parent=0 // pred_check
    %p16 = pneg %p15
  $region15: #{gnn_forward.5} parent=0 // pred_check_branch
    %18 = sbr.rel (%p16) target = $region17
  $region16: #{gnn_forward.5} parent=0 // pred_region
    %19 = vst [vmem:[#allocation2] sm:$0xff] 0.0
    %20 = vst [vmem:[#allocation2 + $0x8] sm:$0xff] 0.0
    %21 = vst [vmem:[#allocation2 + $0x10] sm:$0xff] 0.0
    %22 = vst [vmem:[#allocation2 + $0x18] sm:$0xff] 0.0
    %23 = vst [vmem:[#allocation2 + $0x20] sm:$0xff] 0.0
    %24 = vst [vmem:[#allocation2 + $0x28] sm:$0xff] 0.0
    %25 = vst [vmem:[#allocation2 + $0x30] sm:$0xff] 0.0
    %26 = vst [vmem:[#allocation2 + $0x38] sm:$0xff] 0.0
    %27 = vst [vmem:[#allocation2 + $0x40] sm:$0xff] 0.0
    %28 = vst [vmem:[#allocation2 + $0x48] sm:$0xff] 0.0
    %29 = vst [vmem:[#allocation2 + $0x50] sm:$0xff] 0.0
    %30 = vst [vmem:[#allocation2 + $0x58] sm:$0xff] 0.0
    %31 = vst [vmem:[#allocation2 + $0x60] sm:$0xff] 0.0
    %32 = vst [vmem:[#allocation2 + $0x68] sm:$0xff] 0.0
    %33 = vst [vmem:[#allocation2 + $0x70] sm:$0xff] 0.0
    %34 = vst [vmem:[#allocation2 + $0x78] sm:$0xff] 0.0
  $region17: #{gnn_forward.5} parent=0 // pred_fallthru
    _
  %s35 = smul.u32 0, 128
  %s36 = sshra.s32 %s35, 3
  %s37 = sand.u32 %s35, 7
  %s38 = smul.addr %s36, 4
  %s39 = scalar_lea.vmem %s1, %s38
  %v40 = vld [vmem:[%s39] sm:$0xf]
  %v41 = vld [vmem:[%s39 + $0x4] sm:$0xf]
  %v42 = vld [vmem:[%s39 + $0x8] sm:$0xf]
  %v43 = vld [vmem:[%s39 + $0xc] sm:$0xf]
  %v44 = vld [vmem:[%s39 + $0x10] sm:$0xf]
  %v45 = vld [vmem:[%s39 + $0x14] sm:$0xf]
  %v46 = vld [vmem:[%s39 + $0x18] sm:$0xf]
  %v47 = vld [vmem:[%s39 + $0x1c] sm:$0xf]
  %v48 = vld [vmem:[%s39 + $0x20] sm:$0xf]
  %v49 = vld [vmem:[%s39 + $0x24] sm:$0xf]
  %v50 = vld [vmem:[%s39 + $0x28] sm:$0xf]
  %v51 = vld [vmem:[%s39 + $0x2c] sm:$0xf]
  %v52 = vld [vmem:[%s39 + $0x30] sm:$0xf]
  %v53 = vld [vmem:[%s39 + $0x34] sm:$0xf]
  %v54 = vld [vmem:[%s39 + $0x38] sm:$0xf]
  %v55 = vld [vmem:[%s39 + $0x3c] sm:$0xf]
  %v56 = vld [vmem:[#allocation2] sm:$0xff]
  %v57 = vld [vmem:[#allocation2 + $0x8] sm:$0xff]
  %v58 = vld [vmem:[#allocation2 + $0x10] sm:$0xff]
  %v59 = vld [vmem:[#allocation2 + $0x18] sm:$0xff]
  %v60 = vld [vmem:[#allocation2 + $0x20] sm:$0xff]
  %v61 = vld [vmem:[#allocation2 + $0x28] sm:$0xff]
  %v62 = vld [vmem:[#allocation2 + $0x30] sm:$0xff]
  %v63 = vld [vmem:[#allocation2 + $0x38] sm:$0xff]
  %v64 = vld [vmem:[#allocation2 + $0x40] sm:$0xff]
  %v65 = vld [vmem:[#allocation2 + $0x48] sm:$0xff]
  %v66 = vld [vmem:[#allocation2 + $0x50] sm:$0xff]
  %v67 = vld [vmem:[#allocation2 + $0x58] sm:$0xff]
  %v68 = vld [vmem:[#allocation2 + $0x60] sm:$0xff]
  %v69 = vld [vmem:[#allocation2 + $0x68] sm:$0xff]
  %v70 = vld [vmem:[#allocation2 + $0x70] sm:$0xff]
  %v71 = vld [vmem:[#allocation2 + $0x78] sm:$0xff]
  %v72 = vld [vmem:[%s0] sm:$0xf]
  %v73 = vld [vmem:[%s0 + $0x4] sm:$0xf]
  %v74 = vld [vmem:[%s0 + $0x8] sm:$0xf]
  %v75 = vld [vmem:[%s0 + $0xc] sm:$0xf]
  %v76 = vld [vmem:[%s0 + $0x10] sm:$0xf]
  %v77 = vld [vmem:[%s0 + $0x14] sm:$0xf]
  %v78 = vld [vmem:[%s0 + $0x18] sm:$0xf]
  %v79 = vld [vmem:[%s0 + $0x1c] sm:$0xf]
  %v80 = vld [vmem:[%s0 + $0x20] sm:$0xf]
  %v81 = vld [vmem:[%s0 + $0x24] sm:$0xf]
  %v82 = vld [vmem:[%s0 + $0x28] sm:$0xf]
  %v83 = vld [vmem:[%s0 + $0x2c] sm:$0xf]
  %v84 = vld [vmem:[%s0 + $0x30] sm:$0xf]
  %v85 = vld [vmem:[%s0 + $0x34] sm:$0xf]
  %v86 = vld [vmem:[%s0 + $0x38] sm:$0xf]
  %v87 = vld [vmem:[%s0 + $0x3c] sm:$0xf]
  %v104 = vunpack.c.l.b16 %v72
  %v105 = vunpack.c.l.b16 %v73
  %v106 = vunpack.c.l.b16 %v74
  %v107 = vunpack.c.l.b16 %v75
  %v108 = vunpack.c.l.b16 %v76
  %v109 = vunpack.c.l.b16 %v77
  %v110 = vunpack.c.l.b16 %v78
  %v111 = vunpack.c.l.b16 %v79
  %v112 = vunpack.c.l.b16 %v80
  %v113 = vunpack.c.l.b16 %v81
  %v114 = vunpack.c.l.b16 %v82
  %v115 = vunpack.c.l.b16 %v83
  %v116 = vunpack.c.l.b16 %v84
  %v117 = vunpack.c.l.b16 %v85
  %v118 = vunpack.c.l.b16 %v86
  %v119 = vunpack.c.l.b16 %v87
  %v120 = vpack.c.b16 %v105, %v104
  %v121 = vpack.c.b16 %v107, %v106
  %v122 = vpack.c.b16 %v109, %v108
  %v123 = vpack.c.b16 %v111, %v110
  %v124 = vpack.c.b16 %v113, %v112
  %v125 = vpack.c.b16 %v115, %v114
  %v126 = vpack.c.b16 %v117, %v116
  %v127 = vpack.c.b16 %v119, %v118
  %v152 = vunpack.c.l.b16 %v40
  %v153 = vunpack.c.l.b16 %v41
  %v154 = vunpack.c.l.b16 %v42
  %v155 = vunpack.c.l.b16 %v43
  %v156 = vunpack.c.l.b16 %v44
  %v157 = vunpack.c.l.b16 %v45
  %v158 = vunpack.c.l.b16 %v46
  %v159 = vunpack.c.l.b16 %v47
  %v160 = vunpack.c.l.b16 %v48
  %v161 = vunpack.c.l.b16 %v49
  %v162 = vunpack.c.l.b16 %v50
  %v163 = vunpack.c.l.b16 %v51
  %v164 = vunpack.c.l.b16 %v52
  %v165 = vunpack.c.l.b16 %v53
  %v166 = vunpack.c.l.b16 %v54
  %v167 = vunpack.c.l.b16 %v55
  %v168 = vpack.c.b16 %v153, %v152
  %v169 = vpack.c.b16 %v155, %v154
  %v170 = vpack.c.b16 %v157, %v156
  %v171 = vpack.c.b16 %v159, %v158
  %v172 = vpack.c.b16 %v161, %v160
  %v173 = vpack.c.b16 %v163, %v162
  %v174 = vpack.c.b16 %v165, %v164
  %v175 = vpack.c.b16 %v167, %v166
  %184 = vmatprep.subr.bf16.mxu0 0
  %185 = vmatpush1.bf16.msra.mxu0 %v168
  %186 = vmatprep.subr.bf16.mxu0 0
  %187 = vmatpush1.bf16.msra.mxu0 %v169
  %188 = vmatprep.subr.bf16.mxu0 0
  %189 = vmatpush1.bf16.msra.mxu0 %v170
  %190 = vmatprep.subr.bf16.mxu0 0
  %191 = vmatpush1.bf16.msra.mxu0 %v171
  %192 = vmatprep.subr.bf16.mxu0 0
  %193 = vmatpush1.bf16.msra.mxu0 %v172
  %194 = vmatprep.subr.bf16.mxu0 0
  %195 = vmatpush1.bf16.msra.mxu0 %v173
  %196 = vmatprep.subr.bf16.mxu0 0
  %197 = vmatpush1.bf16.msra.mxu0 %v174
  %198 = vmatprep.subr.bf16.mxu0 0
  %199 = vmatpush1.bf16.msra.mxu0 %v175
  %200 = vmatprep.subr.bf16.mxu0 0
  %201 = vmatpush1.bf16.msra.mxu0 0
  %202 = vmatprep.subr.bf16.mxu0 0
  %203 = vmatpush1.bf16.msra.mxu0 0
  %204 = vmatprep.subr.bf16.mxu0 0
  %205 = vmatpush1.bf16.msra.mxu0 0
  %206 = vmatprep.subr.bf16.mxu0 0
  %207 = vmatpush1.bf16.msra.mxu0 0
  %208 = vmatprep.subr.bf16.mxu0 0
  %209 = vmatpush1.bf16.msra.mxu0 0
  %210 = vmatprep.subr.bf16.mxu0 0
  %211 = vmatpush1.bf16.msra.mxu0 0
  %212 = vmatprep.subr.bf16.mxu0 0
  %213 = vmatpush1.bf16.msra.mxu0 0
  %214 = vmatprep.subr.bf16.mxu0 0
  %215 = vmatpush1.bf16.msra.mxu0 0
  %216 = vmatprep.mubr.bf16.mxu0 0
  %217 = vmatmul.mubr.bf16.gmra.mrb[0].mxu0 %v120
  %v218 = vpop.f32.mrb[0].mxu0
  %v219 = vadd.f32 0.0, %v218
  %v220 = vpop.f32.mrb[0].mxu0
  %v221 = vpop.f32.mrb[0].mxu0
  %v222 = vadd.f32 0.0, %v221
  %v223 = vpop.f32.mrb[0].mxu0
  %224 = vmatprep.mubr.bf16.mxu0 0
  %225 = vmatmul.mubr.bf16.gmra.mrb[0].mxu0 %v121
  %v226 = vpop.f32.mrb[0].mxu0
  %v227 = vadd.f32 0.0, %v226
  %v228 = vpop.f32.mrb[0].mxu0
  %v229 = vpop.f32.mrb[0].mxu0
  %v230 = vadd.f32 0.0, %v229
  %v231 = vpop.f32.mrb[0].mxu0
  %232 = vmatprep.mubr.bf16.mxu0 0
  %233 = vmatmul.mubr.bf16.gmra.mrb[0].mxu0 %v122
  %v234 = vpop.f32.mrb[0].mxu0
  %v235 = vadd.f32 0.0, %v234
  %v236 = vpop.f32.mrb[0].mxu0
  %v237 = vpop.f32.mrb[0].mxu0
  %v238 = vadd.f32 0.0, %v237
  %v239 = vpop.f32.mrb[0].mxu0
  %240 = vmatprep.mubr.bf16.mxu0 0
  %241 = vmatmul.mubr.bf16.gmra.mrb[0].mxu0 %v123
  %v242 = vpop.f32.mrb[0].mxu0
  %v243 = vadd.f32 0.0, %v242
  %v244 = vpop.f32.mrb[0].mxu0
  %v245 = vpop.f32.mrb[0].mxu0
  %v246 = vadd.f32 0.0, %v245
  %v247 = vpop.f32.mrb[0].mxu0
  %248 = vmatprep.mubr.bf16.mxu0 0
  %249 = vmatmul.mubr.bf16.gmra.mrb[0].mxu0 %v124
  %v250 = vpop.f32.mrb[0].mxu0
  %v251 = vadd.f32 0.0, %v250
  %v252 = vpop.f32.mrb[0].mxu0
  %v253 = vpop.f32.mrb[0].mxu0
  %v254 = vadd.f32 0.0, %v253
  %v255 = vpop.f32.mrb[0].mxu0
  %256 = vmatprep.mubr.bf16.mxu0 0
  %257 = vmatmul.mubr.bf16.gmra.mrb[0].mxu0 %v125
  %v258 = vpop.f32.mrb[0].mxu0
  %v259 = vadd.f32 0.0, %v258
  %v260 = vpop.f32.mrb[0].mxu0
  %v261 = vpop.f32.mrb[0].mxu0
  %v262 = vadd.f32 0.0, %v261
  %v263 = vpop.f32.mrb[0].mxu0
  %264 = vmatprep.mubr.bf16.mxu0 0
  %265 = vmatmul.mubr.bf16.gmra.mrb[0].mxu0 %v126
  %v266 = vpop.f32.mrb[0].mxu0
  %v267 = vadd.f32 0.0, %v266
  %v268 = vpop.f32.mrb[0].mxu0
  %v269 = vpop.f32.mrb[0].mxu0
  %v270 = vadd.f32 0.0, %v269
  %v271 = vpop.f32.mrb[0].mxu0
  %272 = vmatprep.mubr.bf16.mxu0 0
  %273 = vmatmul.mubr.bf16.gmra.mrb[0].mxu0 %v127
  %v274 = vpop.f32.mrb[0].mxu0
  %v275 = vadd.f32 0.0, %v274
  %v276 = vpop.f32.mrb[0].mxu0
  %v277 = vpop.f32.mrb[0].mxu0
  %v278 = vadd.f32 0.0, %v277
  %v279 = vpop.f32.mrb[0].mxu0
  %280 = vdwg.mxu0
  %v281 = vadd.f32 %v56, %v219
  %v282 = vadd.f32 %v57, %v222
  %v283 = vadd.f32 %v58, %v227
  %v284 = vadd.f32 %v59, %v230
  %v285 = vadd.f32 %v60, %v235
  %v286 = vadd.f32 %v61, %v238
  %v287 = vadd.f32 %v62, %v243
  %v288 = vadd.f32 %v63, %v246
  %v289 = vadd.f32 %v64, %v251
  %v290 = vadd.f32 %v65, %v254
  %v291 = vadd.f32 %v66, %v259
  %v292 = vadd.f32 %v67, %v262
  %v293 = vadd.f32 %v68, %v267
  %v294 = vadd.f32 %v69, %v270
  %v295 = vadd.f32 %v70, %v275
  %v296 = vadd.f32 %v71, %v278
  %297 = vst [vmem:[#allocation2] sm:$0xff] %v281
  %298 = vst [vmem:[#allocation2 + $0x8] sm:$0xff] %v282
  %299 = vst [vmem:[#allocation2 + $0x10] sm:$0xff] %v283
  %300 = vst [vmem:[#allocation2 + $0x18] sm:$0xff] %v284
  %301 = vst [vmem:[#allocation2 + $0x20] sm:$0xff] %v285
  %302 = vst [vmem:[#allocation2 + $0x28] sm:$0xff] %v286
  %303 = vst [vmem:[#allocation2 + $0x30] sm:$0xff] %v287
  %304 = vst [vmem:[#allocation2 + $0x38] sm:$0xff] %v288
  %305 = vst [vmem:[#allocation2 + $0x40] sm:$0xff] %v289
  %306 = vst [vmem:[#allocation2 + $0x48] sm:$0xff] %v290
  %307 = vst [vmem:[#allocation2 + $0x50] sm:$0xff] %v291
  %308 = vst [vmem:[#allocation2 + $0x58] sm:$0xff] %v292
  %309 = vst [vmem:[#allocation2 + $0x60] sm:$0xff] %v293
  %310 = vst [vmem:[#allocation2 + $0x68] sm:$0xff] %v294
  %311 = vst [vmem:[#allocation2 + $0x70] sm:$0xff] %v295
  %312 = vst [vmem:[#allocation2 + $0x78] sm:$0xff] %v296
  // Predicated region
  $region18: #{gnn_forward.5} parent=0 // pred_check
    %p313 = pneg %p15
  $region19: #{gnn_forward.5} parent=0 // pred_check_branch
    %315 = sbr.rel (%p313) target = $region21
  $region20: #{gnn_forward.5} parent=0 // pred_region
    %v316 = vld [vmem:[#allocation2] sm:$0xff]
    %v317 = vld [vmem:[#allocation2 + $0x8] sm:$0xff]
    %v318 = vld [vmem:[#allocation2 + $0x10] sm:$0xff]
    %v319 = vld [vmem:[#allocation2 + $0x18] sm:$0xff]
    %v320 = vld [vmem:[#allocation2 + $0x20] sm:$0xff]
    %v321 = vld [vmem:[#allocation2 + $0x28] sm:$0xff]
    %v322 = vld [vmem:[#allocation2 + $0x30] sm:$0xff]
    %v323 = vld [vmem:[#allocation2 + $0x38] sm:$0xff]
    %v324 = vld [vmem:[#allocation2 + $0x40] sm:$0xff]
    %v325 = vld [vmem:[#allocation2 + $0x48] sm:$0xff]
    %v326 = vld [vmem:[#allocation2 + $0x50] sm:$0xff]
    %v327 = vld [vmem:[#allocation2 + $0x58] sm:$0xff]
    %v328 = vld [vmem:[#allocation2 + $0x60] sm:$0xff]
    %v329 = vld [vmem:[#allocation2 + $0x68] sm:$0xff]
    %v330 = vld [vmem:[#allocation2 + $0x70] sm:$0xff]
    %v331 = vld [vmem:[#allocation2 + $0x78] sm:$0xff]
    %v332 = vld [vmem:[%s2] sm:$0x1]
    %v334 = vlaneseq
    %v335 = vshrl.u32 %v334, 7
    %v336 = vsub.s32 0, %v335
    %v337 = vrot.slane %v332, %v336
    %v339 = vadd.f32 %v316, %v337
    %v340 = vadd.f32 %v317, %v337
    %v341 = vadd.f32 %v318, %v337
    %v342 = vadd.f32 %v319, %v337
    %v343 = vadd.f32 %v320, %v337
    %v344 = vadd.f32 %v321, %v337
    %v345 = vadd.f32 %v322, %v337
    %v346 = vadd.f32 %v323, %v337
    %v347 = vadd.f32 %v324, %v337
    %v348 = vadd.f32 %v325, %v337
    %v349 = vadd.f32 %v326, %v337
    %v350 = vadd.f32 %v327, %v337
    %v351 = vadd.f32 %v328, %v337
    %v352 = vadd.f32 %v329, %v337
    %v353 = vadd.f32 %v330, %v337
    %v354 = vadd.f32 %v331, %v337
    %v355 = vlaneseq
    %v356 = vand.u32 %v355, 127
    %vm357 = vcmp.lt.s32.totalorder %v356, 8
    %v358 = vsel %vm357, %v339, -1e+30
    %v359 = vsel %vm357, %v340, -1e+30
    %v360 = vsel %vm357, %v341, -1e+30
    %v361 = vsel %vm357, %v342, -1e+30
    %v362 = vsel %vm357, %v343, -1e+30
    %v363 = vsel %vm357, %v344, -1e+30
    %v364 = vsel %vm357, %v345, -1e+30
    %v365 = vsel %vm357, %v346, -1e+30
    %v366 = vsel %vm357, %v347, -1e+30
    %v367 = vsel %vm357, %v348, -1e+30
    %v368 = vsel %vm357, %v349, -1e+30
    %v369 = vsel %vm357, %v350, -1e+30
    %v370 = vsel %vm357, %v351, -1e+30
    %v371 = vsel %vm357, %v352, -1e+30
    %v372 = vsel %vm357, %v353, -1e+30
    %v373 = vsel %vm357, %v354, -1e+30
    %374 = vmax.xlane.f32.xlu0 %v358
    %v375 = vpop.xlane.xlu0 %374
    %376 = vmax.xlane.f32.xlu0 %v359
    %v377 = vpop.xlane.xlu0 %376
    %378 = vmax.xlane.f32.xlu0 %v360
    %v379 = vpop.xlane.xlu0 %378
    %380 = vmax.xlane.f32.xlu0 %v361
    %v381 = vpop.xlane.xlu0 %380
    %382 = vmax.xlane.f32.xlu0 %v362
    %v383 = vpop.xlane.xlu0 %382
    %384 = vmax.xlane.f32.xlu0 %v363
    %v385 = vpop.xlane.xlu0 %384
    %386 = vmax.xlane.f32.xlu0 %v364
    %v387 = vpop.xlane.xlu0 %386
    %388 = vmax.xlane.f32.xlu0 %v365
    %v389 = vpop.xlane.xlu0 %388
    %390 = vmax.xlane.f32.xlu0 %v366
    %v391 = vpop.xlane.xlu0 %390
    %392 = vmax.xlane.f32.xlu0 %v367
    %v393 = vpop.xlane.xlu0 %392
    %394 = vmax.xlane.f32.xlu0 %v368
    %v395 = vpop.xlane.xlu0 %394
    %396 = vmax.xlane.f32.xlu0 %v369
    %v397 = vpop.xlane.xlu0 %396
    %398 = vmax.xlane.f32.xlu0 %v370
    %v399 = vpop.xlane.xlu0 %398
    %400 = vmax.xlane.f32.xlu0 %v371
    %v401 = vpop.xlane.xlu0 %400
    %402 = vmax.xlane.f32.xlu0 %v372
    %v403 = vpop.xlane.xlu0 %402
    %404 = vmax.xlane.f32.xlu0 %v373
    %v405 = vpop.xlane.xlu0 %404
    %v406 = vsub.f32 %v358, %v375
    %v407 = vsub.f32 %v359, %v377
    %v408 = vsub.f32 %v360, %v379
    %v409 = vsub.f32 %v361, %v381
    %v410 = vsub.f32 %v362, %v383
    %v411 = vsub.f32 %v363, %v385
    %v412 = vsub.f32 %v364, %v387
    %v413 = vsub.f32 %v365, %v389
    %v414 = vsub.f32 %v366, %v391
    %v415 = vsub.f32 %v367, %v393
    %v416 = vsub.f32 %v368, %v395
    %v417 = vsub.f32 %v369, %v397
    %v418 = vsub.f32 %v370, %v399
    %v419 = vsub.f32 %v371, %v401
    %v420 = vsub.f32 %v372, %v403
    %v421 = vsub.f32 %v373, %v405
    %v422 = vmul.f32 %v406, 1.442695
    %v423 = vpow.pop %v422
    %v424 = vmul.f32 %v407, 1.442695
    %v425 = vpow.pop %v424
    %v426 = vmul.f32 %v408, 1.442695
    %v427 = vpow.pop %v426
    %v428 = vmul.f32 %v409, 1.442695
    %v429 = vpow.pop %v428
    %v430 = vmul.f32 %v410, 1.442695
    %v431 = vpow.pop %v430
    %v432 = vmul.f32 %v411, 1.442695
    %v433 = vpow.pop %v432
    %v434 = vmul.f32 %v412, 1.442695
    %v435 = vpow.pop %v434
    %v436 = vmul.f32 %v413, 1.442695
    %v437 = vpow.pop %v436
    %v438 = vmul.f32 %v414, 1.442695
    %v439 = vpow.pop %v438
    %v440 = vmul.f32 %v415, 1.442695
    %v441 = vpow.pop %v440
    %v442 = vmul.f32 %v416, 1.442695
    %v443 = vpow.pop %v442
    %v444 = vmul.f32 %v417, 1.442695
    %v445 = vpow.pop %v444
    %v446 = vmul.f32 %v418, 1.442695
    %v447 = vpow.pop %v446
    %v448 = vmul.f32 %v419, 1.442695
    %v449 = vpow.pop %v448
    %v450 = vmul.f32 %v420, 1.442695
    %v451 = vpow.pop %v450
    %v452 = vmul.f32 %v421, 1.442695
    %v453 = vpow.pop %v452
    %454 = vadd.xlane.f32.xlu0 %v423
    %v455 = vpop.xlane.xlu0 %454
    %456 = vadd.xlane.f32.xlu0 %v425
    %v457 = vpop.xlane.xlu0 %456
    %458 = vadd.xlane.f32.xlu0 %v427
    %v459 = vpop.xlane.xlu0 %458
    %460 = vadd.xlane.f32.xlu0 %v429
    %v461 = vpop.xlane.xlu0 %460
    %462 = vadd.xlane.f32.xlu0 %v431
    %v463 = vpop.xlane.xlu0 %462
    %464 = vadd.xlane.f32.xlu0 %v433
    %v465 = vpop.xlane.xlu0 %464
    %466 = vadd.xlane.f32.xlu0 %v435
    %v467 = vpop.xlane.xlu0 %466
    %468 = vadd.xlane.f32.xlu0 %v437
    %v469 = vpop.xlane.xlu0 %468
    %470 = vadd.xlane.f32.xlu0 %v439
    %v471 = vpop.xlane.xlu0 %470
    %472 = vadd.xlane.f32.xlu0 %v441
    %v473 = vpop.xlane.xlu0 %472
    %474 = vadd.xlane.f32.xlu0 %v443
    %v475 = vpop.xlane.xlu0 %474
    %476 = vadd.xlane.f32.xlu0 %v445
    %v477 = vpop.xlane.xlu0 %476
    %478 = vadd.xlane.f32.xlu0 %v447
    %v479 = vpop.xlane.xlu0 %478
    %480 = vadd.xlane.f32.xlu0 %v449
    %v481 = vpop.xlane.xlu0 %480
    %482 = vadd.xlane.f32.xlu0 %v451
    %v483 = vpop.xlane.xlu0 %482
    %484 = vadd.xlane.f32.xlu0 %v453
    %v485 = vpop.xlane.xlu0 %484
    %v486 = vlog2.pop %v455
    %v487 = vmul.f32 %v486, 0.6931472
    %v488 = vlog2.pop %v457
    %v489 = vmul.f32 %v488, 0.6931472
    %v490 = vlog2.pop %v459
    %v491 = vmul.f32 %v490, 0.6931472
    %v492 = vlog2.pop %v461
    %v493 = vmul.f32 %v492, 0.6931472
    %v494 = vlog2.pop %v463
    %v495 = vmul.f32 %v494, 0.6931472
    %v496 = vlog2.pop %v465
    %v497 = vmul.f32 %v496, 0.6931472
    %v498 = vlog2.pop %v467
    %v499 = vmul.f32 %v498, 0.6931472
    %v500 = vlog2.pop %v469
    %v501 = vmul.f32 %v500, 0.6931472
    %v502 = vlog2.pop %v471
    %v503 = vmul.f32 %v502, 0.6931472
    %v504 = vlog2.pop %v473
    %v505 = vmul.f32 %v504, 0.6931472
    %v506 = vlog2.pop %v475
    %v507 = vmul.f32 %v506, 0.6931472
    %v508 = vlog2.pop %v477
    %v509 = vmul.f32 %v508, 0.6931472
    %v510 = vlog2.pop %v479
    %v511 = vmul.f32 %v510, 0.6931472
    %v512 = vlog2.pop %v481
    %v513 = vmul.f32 %v512, 0.6931472
    %v514 = vlog2.pop %v483
    %v515 = vmul.f32 %v514, 0.6931472
    %v516 = vlog2.pop %v485
    %v517 = vmul.f32 %v516, 0.6931472
    %v518 = vadd.f32 %v487, %v375
    %v519 = vadd.f32 %v489, %v377
    %v520 = vadd.f32 %v491, %v379
    %v521 = vadd.f32 %v493, %v381
    %v522 = vadd.f32 %v495, %v383
    %v523 = vadd.f32 %v497, %v385
    %v524 = vadd.f32 %v499, %v387
    %v525 = vadd.f32 %v501, %v389
    %v526 = vadd.f32 %v503, %v391
    %v527 = vadd.f32 %v505, %v393
    %v528 = vadd.f32 %v507, %v395
    %v529 = vadd.f32 %v509, %v397
    %v530 = vadd.f32 %v511, %v399
    %v531 = vadd.f32 %v513, %v401
    %v532 = vadd.f32 %v515, %v403
    %v533 = vadd.f32 %v517, %v405
    %v534 = vsub.f32 %v358, %v518
    %v535 = vsub.f32 %v359, %v519
    %v536 = vsub.f32 %v360, %v520
    %v537 = vsub.f32 %v361, %v521
    %v538 = vsub.f32 %v362, %v522
    %v539 = vsub.f32 %v363, %v523
    %v540 = vsub.f32 %v364, %v524
    %v541 = vsub.f32 %v365, %v525
    %v542 = vsub.f32 %v366, %v526
    %v543 = vsub.f32 %v367, %v527
    %v544 = vsub.f32 %v368, %v528
    %v545 = vsub.f32 %v369, %v529
    %v546 = vsub.f32 %v370, %v530
    %v547 = vsub.f32 %v371, %v531
    %v548 = vsub.f32 %v372, %v532
    %v549 = vsub.f32 %v373, %v533
    %550 = vst [vmem:[%s3] sm:$0xff] %v534
    %551 = vst [vmem:[%s3 + $0x8] sm:$0xff] %v535
    %552 = vst [vmem:[%s3 + $0x10] sm:$0xff] %v536
    %553 = vst [vmem:[%s3 + $0x18] sm:$0xff] %v537
    %554 = vst [vmem:[%s3 + $0x20] sm:$0xff] %v538
    %555 = vst [vmem:[%s3 + $0x28] sm:$0xff] %v539
    %556 = vst [vmem:[%s3 + $0x30] sm:$0xff] %v540
    %557 = vst [vmem:[%s3 + $0x38] sm:$0xff] %v541
    %558 = vst [vmem:[%s3 + $0x40] sm:$0xff] %v542
    %559 = vst [vmem:[%s3 + $0x48] sm:$0xff] %v543
    %560 = vst [vmem:[%s3 + $0x50] sm:$0xff] %v544
    %561 = vst [vmem:[%s3 + $0x58] sm:$0xff] %v545
    %562 = vst [vmem:[%s3 + $0x60] sm:$0xff] %v546
    %563 = vst [vmem:[%s3 + $0x68] sm:$0xff] %v547
    %564 = vst [vmem:[%s3 + $0x70] sm:$0xff] %v548
    %565 = vst [vmem:[%s3 + $0x78] sm:$0xff] %v549
  $region21: #{gnn_forward.5} parent=0 // pred_fallthru
    _
  // Predicated region
  $region22: #{gnn_forward.5} parent=0 // pred_check
    _
  $region23: #{gnn_forward.5} parent=0 // pred_check_branch
    %567 = sbr.rel (0) target = $region25
  $region24: #{gnn_forward.5} parent=0 // pred_region
    _
  $region25: #{gnn_forward.5} parent=0 // pred_fallthru
    _
  // Predicated region
  $region26: #{gnn_forward.5} parent=0 // pred_check
    _
  $region27: #{gnn_forward.5} parent=0 // pred_check_branch
    %569 = sbr.rel (0) target = $region29
  $region28: #{gnn_forward.5} parent=0 // pred_region
    _
  $region29: #{gnn_forward.5} parent=0 // pred_fallthru
    _

</llo_original>
